<compile_context>
chip_gen: v7x
topology: tpu7x:2x2x1
jax: 0.10.0
libtpu: 0.0.40
codegen_flags: <defaults>
</compile_context>

<pallas_src>
import functools

import jax
import jax.numpy as jnp
from jax.experimental import pallas as pl
from jax.experimental.pallas import tpu as pltpu


def _fused_kernel(x_ref, w_ref, b_ref, o_ref, *, tr, n_kh, ow):
    # x_ref : (H_pad, KW*Cin, Wp) resident kw-folded input, x_ref[h, kw*Cin+c, w] = x[c, h, w+kw]
    # w_ref : (64, KH*KW*Cin)     folded weight (K order: kh, kw, cin)
    # b_ref : (64, 1)             folded bias
    # o_ref : (tr, 64, OW)        output block for output rows [i*tr, i*tr+tr)
    r0 = pl.program_id(0) * tr
    for r in range(tr):                                   # static unroll over the row strip
        row = r0 + r
        # im2col for one output row, built in VMEM: concat the KH shifted rows along sublanes.
        patch = jnp.concatenate([x_ref[row + i] for i in range(n_kh)], axis=0)  # (128, Wp)
        y = jnp.dot(w_ref[...], patch, preferred_element_type=jnp.float32)      # (64, Wp)
        y = jnp.maximum(y + b_ref[...], 0.0) - 1.0
        o_ref[r] = y[:, :ow].astype(o_ref.dtype)          # dense, first-axis-indexed store


def fused_conv_chain(x_kw, w_cp, b_col, *, oh, ow, tr):
    """x_kw: (H_pad, KW*Cin, Wp); w_cp: (64, KH*KW*Cin); b_col: (64, 1) -> (OH, 64, OW)."""
    h_pad, krows, wp = x_kw.shape
    c2, kdim = w_cp.shape
    n_kh = kdim // krows                                   # = KH (4)
    n_tiles = -(-oh // tr)

    kernel = functools.partial(_fused_kernel, tr=tr, n_kh=n_kh, ow=ow)
    out = pl.pallas_call(
        kernel,
        out_shape=jax.ShapeDtypeStruct((n_tiles * tr, c2, ow), jnp.float32),
        grid_spec=pltpu.PrefetchScalarGridSpec(
            num_scalar_prefetch=0,
            grid=(n_tiles,),
            in_specs=[
                pl.BlockSpec((h_pad, krows, wp), lambda i: (0, 0, 0)),  # resident, DMA'd once
                pl.BlockSpec((c2, kdim), lambda i: (0, 0)),             # folded weight
                pl.BlockSpec((c2, 1), lambda i: (0, 0)),                # folded bias
            ],
            out_specs=pl.BlockSpec((tr, c2, ow), lambda i: (i, 0, 0)),
        ),
        compiler_params=pltpu.CompilerParams(
            dimension_semantics=("parallel",),
            vmem_limit_bytes=48 * 1024 * 1024),
    )(x_kw, w_cp, b_col)
    return out[:oh]                                        # drop rows of the ragged last strip


def model_forward(x1, params):
    """x1: (1, 8, H, W) float32 -> (64, OH, OW), matching the PyTorch module."""
    w1, b1, w2, b2 = params
    cout1, cin, kh, kw = w1.shape          # (128, 8, 4, 4)
    cout2 = w2.shape[0]                    # 64
    _, _, h, w = x1.shape
    oh, ow = h - kh + 1, w - kw + 1

    # --- fold conv2(conv1(x) - 199) - 0.555556 into one matmul + bias (tiny one-time ops) ---
    w1_mat = w1.reshape(cout1, cin * kh * kw)              # K order (cin, kh, kw)
    w2_mat = w2.reshape(cout2, cout1)
    w_c = jnp.dot(w2_mat, w1_mat, precision=jax.lax.Precision.HIGHEST)          # (64, 128)
    b_c = jnp.dot(w2_mat, b1 - 199.0,
                  precision=jax.lax.Precision.HIGHEST) + (b2 - 0.555556)        # (64,)
    # Re-order K to (kh, kw, cin) to match the in-kernel patch layout.
    w_cp = (w_c.reshape(cout2, cin, kh, kw)
            .transpose(0, 2, 3, 1)
            .reshape(cout2, cin * kh * kw))

    # --- compact kw-folded input: x_kw[h, j*cin + c, w] = x[c, h, w + j], lane-padded ---
    wp = ((w + 127) // 128) * 128
    x0 = x1[0]                                             # (cin, H, W)
    shifted = []
    for j in range(kw):
        s = x0[:, :, j:]                                   # (cin, H, W-j)
        s = jnp.pad(s, ((0, 0), (0, 0), (0, wp - (w - j))))
        shifted.append(s)
    x_kw = jnp.stack(shifted, axis=0)                      # (kw, cin, H, Wp)
    x_kw = x_kw.transpose(2, 0, 1, 3).reshape(h, kw * cin, wp)

    tr = 16 if oh >= 128 else 8
    n_tiles = -(-oh // tr)
    h_pad = n_tiles * tr + (kh - 1)                        # all in-kernel row reads in-bounds
    x_kw = jnp.pad(x_kw, ((0, h_pad - h), (0, 0), (0, 0)))

    out = fused_conv_chain(x_kw, w_cp, b_c.reshape(cout2, 1), oh=oh, ow=ow, tr=tr)
    # (OH, 64, OW) -> (64, OH, OW)  == torch.squeeze(x7, 0)
    return jnp.transpose(out, (1, 0, 2))


def reference_forward(x1, params):
    """Pure-JAX reference (lax conv) of the PyTorch forward, for a sanity check."""
    w1, b1, w2, b2 = params
    dn1 = jax.lax.conv_dimension_numbers(x1.shape, w1.shape, ("NCHW", "OIHW", "NCHW"))
    x2 = jax.lax.conv_general_dilated(
        x1, w1, (1, 1), "VALID", dimension_numbers=dn1,
        precision=jax.lax.Precision.HIGHEST) + b1.reshape(1, -1, 1, 1)
    x3 = x2 - 199.0
    dn2 = jax.lax.conv_dimension_numbers(x3.shape, w2.shape, ("NCHW", "OIHW", "NCHW"))
    x4 = jax.lax.conv_general_dilated(
        x3, w2, (1, 1), "VALID", dimension_numbers=dn2,
        precision=jax.lax.Precision.HIGHEST) + b2.reshape(1, -1, 1, 1)
    x5 = x4 - 0.555556
    x6 = jnp.maximum(x5, 0.0)
    x7 = x6 - 1.0
    return jnp.squeeze(x7, 0)


def init_params(key):
    k1, k2, k3, k4 = jax.random.split(key, 4)
    # Conv2d(8, 128, 4) and Conv2d(128, 64, 1), PyTorch-style uniform init bounds.
    fan1 = 8 * 4 * 4
    fan2 = 128 * 1 * 1
    w1 = jax.random.uniform(k1, (128, 8, 4, 4), jnp.float32,
                            -1.0 / jnp.sqrt(fan1), 1.0 / jnp.sqrt(fan1))
    b1 = jax.random.uniform(k2, (128,), jnp.float32,
                            -1.0 / jnp.sqrt(fan1), 1.0 / jnp.sqrt(fan1))
    w2 = jax.random.uniform(k3, (64, 128, 1, 1), jnp.float32,
                            -1.0 / jnp.sqrt(fan2), 1.0 / jnp.sqrt(fan2))
    b2 = jax.random.uniform(k4, (64,), jnp.float32,
                            -1.0 / jnp.sqrt(fan2), 1.0 / jnp.sqrt(fan2))
    return w1, b1, w2, b2


if __name__ == "__main__":
    key = jax.random.PRNGKey(0)
    kx, kp = jax.random.split(key)
    # Small spatial size consistent with the module (channels/kernel fixed by __init__).
    H = W = 32
    x1 = jax.random.normal(kx, (1, 8, H, W), jnp.float32)
    params = init_params(kp)

    out = jax.block_until_ready(jax.jit(model_forward)(x1, params))

    # conv1 kernel 4 -> OH = H - 3; final shape (64, 29, 29)
    assert out.shape == (64, H - 3, W - 3), out.shape
    ref = jax.block_until_ready(jax.jit(reference_forward)(x1, params))
    max_diff = float(jnp.max(jnp.abs(out - ref)))
    assert bool(jnp.allclose(out, ref, rtol=2e-2, atol=2e-2)), (
        "max abs diff %.3e" % max_diff)
    print("KERNEL_OK")
</pallas_src>

<mosaic_0001>
module attributes {stable_mosaic.version = 11 : i64} {
  func.func @_fused_kernel(%arg0: i32, %arg1: memref<35x32x128xf32, #tpu.memory_space<vmem>>, %arg2: memref<64x128xf32, #tpu.memory_space<vmem>>, %arg3: memref<64x1xf32, #tpu.memory_space<vmem>>, %arg4: memref<8x64x29xf32, #tpu.memory_space<vmem>>) attributes {dimension_semantics = [#tpu.dimension_semantics<parallel>], iteration_bounds = array<i64: 4>, scalar_prefetch = 0 : i64, scratch_operands = 0 : i64, tpu.core_type = #tpu.core_type<tc>, window_params = [{pipeline_mode = #tpu.pipeline_mode<synchronous>, transform_indices = @transform_0, window_bounds = array<i64: 35, 32, 128>}, {pipeline_mode = #tpu.pipeline_mode<synchronous>, transform_indices = @transform_1, window_bounds = array<i64: 64, 128>}, {pipeline_mode = #tpu.pipeline_mode<synchronous>, transform_indices = @transform_2, window_bounds = array<i64: 64, 1>}, {transform_indices = @transform_3, window_bounds = array<i64: 8, 64, 29>}]} {
    %c8_i32 = arith.constant 8 : i32
    %0 = arith.muli %arg0, %c8_i32 : i32
    %c0_i32 = arith.constant 0 : i32
    %1 = arith.addi %0, %c0_i32 : i32
    %c0_i32_0 = arith.constant 0 : i32
    %2 = arith.addi %1, %c0_i32_0 : i32
    %3 = arith.index_cast %2 : i32 to index
    %c0 = arith.constant 0 : index
    %c0_1 = arith.constant 0 : index
    %4 = vector.load %arg1[%3, %c0, %c0_1] : memref<35x32x128xf32, #tpu.memory_space<vmem>>, vector<1x32x128xf32>
    %5 = vector.shape_cast %4 : vector<1x32x128xf32> to vector<32x128xf32>
    %c1_i32 = arith.constant 1 : i32
    %6 = arith.addi %1, %c1_i32 : i32
    %7 = arith.index_cast %6 : i32 to index
    %c0_2 = arith.constant 0 : index
    %c0_3 = arith.constant 0 : index
    %8 = vector.load %arg1[%7, %c0_2, %c0_3] : memref<35x32x128xf32, #tpu.memory_space<vmem>>, vector<1x32x128xf32>
    %9 = vector.shape_cast %8 : vector<1x32x128xf32> to vector<32x128xf32>
    %c2_i32 = arith.constant 2 : i32
    %10 = arith.addi %1, %c2_i32 : i32
    %11 = arith.index_cast %10 : i32 to index
    %c0_4 = arith.constant 0 : index
    %c0_5 = arith.constant 0 : index
    %12 = vector.load %arg1[%11, %c0_4, %c0_5] : memref<35x32x128xf32, #tpu.memory_space<vmem>>, vector<1x32x128xf32>
    %13 = vector.shape_cast %12 : vector<1x32x128xf32> to vector<32x128xf32>
    %c3_i32 = arith.constant 3 : i32
    %14 = arith.addi %1, %c3_i32 : i32
    %15 = arith.index_cast %14 : i32 to index
    %c0_6 = arith.constant 0 : index
    %c0_7 = arith.constant 0 : index
    %16 = vector.load %arg1[%15, %c0_6, %c0_7] : memref<35x32x128xf32, #tpu.memory_space<vmem>>, vector<1x32x128xf32>
    %17 = vector.shape_cast %16 : vector<1x32x128xf32> to vector<32x128xf32>
    %18 = tpu.concatenate %5, %9, %13, %17 in 0 : vector<32x128xf32>, vector<32x128xf32>, vector<32x128xf32>, vector<32x128xf32> -> vector<128x128xf32>
    %c0_8 = arith.constant 0 : index
    %c0_9 = arith.constant 0 : index
    %19 = vector.load %arg2[%c0_8, %c0_9] : memref<64x128xf32, #tpu.memory_space<vmem>>, vector<64x128xf32>
    %cst = arith.constant dense<0.000000e+00> : vector<64x128xf32>
    %20 = tpu.matmul %19, %18, %cst {dimension_numbers = #tpu.dot_dimension_numbers<[1], [0], [0], [1], [0, 0, 1, 1], [], []>} : vector<64x128xf32>, vector<128x128xf32>, vector<64x128xf32> -> vector<64x128xf32>
    %c0_10 = arith.constant 0 : index
    %c0_11 = arith.constant 0 : index
    %21 = vector.load %arg3[%c0_10, %c0_11] : memref<64x1xf32, #tpu.memory_space<vmem>>, vector<64x1xf32>
    %22 = vector.broadcast %21 : vector<64x1xf32> to vector<64x128xf32>
    %23 = arith.addf %20, %22 : vector<64x128xf32>
    %cst_12 = arith.constant 0.000000e+00 : f32
    %24 = vector.broadcast %cst_12 : f32 to vector<64x128xf32>
    %25 = arith.maximumf %23, %24 : vector<64x128xf32>
    %cst_13 = arith.constant 1.000000e+00 : f32
    %26 = vector.broadcast %cst_13 : f32 to vector<64x128xf32>
    %27 = arith.subf %25, %26 : vector<64x128xf32>
    %28 = vector.extract_strided_slice %27 {offsets = [0, 0], sizes = [64, 29], strides = [1, 1]} : vector<64x128xf32> to vector<64x29xf32>
    %c0_14 = arith.constant 0 : index
    %c0_15 = arith.constant 0 : index
    %c0_16 = arith.constant 0 : index
    %29 = vector.load %arg4[%c0_14, %c0_15, %c0_16] : memref<8x64x29xf32, #tpu.memory_space<vmem>>, vector<1x64x29xf32>
    %30 = vector.shape_cast %29 : vector<1x64x29xf32> to vector<64x29xf32>
    %31 = vector.shape_cast %28 : vector<64x29xf32> to vector<1x64x29xf32>
    tpu.vector_store %arg4[%c0_14, %c0_15, %c0_16], %31 {strides = array<i32>} : memref<8x64x29xf32, #tpu.memory_space<vmem>>, vector<1x64x29xf32>,
    %c1_i32_17 = arith.constant 1 : i32
    %32 = arith.addi %0, %c1_i32_17 : i32
    %c0_i32_18 = arith.constant 0 : i32
    %33 = arith.addi %32, %c0_i32_18 : i32
    %34 = arith.index_cast %33 : i32 to index
    %c0_19 = arith.constant 0 : index
    %c0_20 = arith.constant 0 : index
    %35 = vector.load %arg1[%34, %c0_19, %c0_20] : memref<35x32x128xf32, #tpu.memory_space<vmem>>, vector<1x32x128xf32>
    %36 = vector.shape_cast %35 : vector<1x32x128xf32> to vector<32x128xf32>
    %c1_i32_21 = arith.constant 1 : i32
    %37 = arith.addi %32, %c1_i32_21 : i32
    %38 = arith.index_cast %37 : i32 to index
    %c0_22 = arith.constant 0 : index
    %c0_23 = arith.constant 0 : index
    %39 = vector.load %arg1[%38, %c0_22, %c0_23] : memref<35x32x128xf32, #tpu.memory_space<vmem>>, vector<1x32x128xf32>
    %40 = vector.shape_cast %39 : vector<1x32x128xf32> to vector<32x128xf32>
    %c2_i32_24 = arith.constant 2 : i32
    %41 = arith.addi %32, %c2_i32_24 : i32
    %42 = arith.index_cast %41 : i32 to index
    %c0_25 = arith.constant 0 : index
    %c0_26 = arith.constant 0 : index
    %43 = vector.load %arg1[%42, %c0_25, %c0_26] : memref<35x32x128xf32, #tpu.memory_space<vmem>>, vector<1x32x128xf32>
    %44 = vector.shape_cast %43 : vector<1x32x128xf32> to vector<32x128xf32>
    %c3_i32_27 = arith.constant 3 : i32
    %45 = arith.addi %32, %c3_i32_27 : i32
    %46 = arith.index_cast %45 : i32 to index
    %c0_28 = arith.constant 0 : index
    %c0_29 = arith.constant 0 : index
    %47 = vector.load %arg1[%46, %c0_28, %c0_29] : memref<35x32x128xf32, #tpu.memory_space<vmem>>, vector<1x32x128xf32>
    %48 = vector.shape_cast %47 : vector<1x32x128xf32> to vector<32x128xf32>
    %49 = tpu.concatenate %36, %40, %44, %48 in 0 : vector<32x128xf32>, vector<32x128xf32>, vector<32x128xf32>, vector<32x128xf32> -> vector<128x128xf32>
    %c0_30 = arith.constant 0 : index
    %c0_31 = arith.constant 0 : index
    %50 = vector.load %arg2[%c0_30, %c0_31] : memref<64x128xf32, #tpu.memory_space<vmem>>, vector<64x128xf32>
    %cst_32 = arith.constant dense<0.000000e+00> : vector<64x128xf32>
    %51 = tpu.matmul %50, %49, %cst_32 {dimension_numbers = #tpu.dot_dimension_numbers<[1], [0], [0], [1], [0, 0, 1, 1], [], []>} : vector<64x128xf32>, vector<128x128xf32>, vector<64x128xf32> -> vector<64x128xf32>
    %c0_33 = arith.constant 0 : index
    %c0_34 = arith.constant 0 : index
    %52 = vector.load %arg3[%c0_33, %c0_34] : memref<64x1xf32, #tpu.memory_space<vmem>>, vector<64x1xf32>
    %53 = vector.broadcast %52 : vector<64x1xf32> to vector<64x128xf32>
    %54 = arith.addf %51, %53 : vector<64x128xf32>
    %cst_35 = arith.constant 0.000000e+00 : f32
    %55 = vector.broadcast %cst_35 : f32 to vector<64x128xf32>
    %56 = arith.maximumf %54, %55 : vector<64x128xf32>
    %cst_36 = arith.constant 1.000000e+00 : f32
    %57 = vector.broadcast %cst_36 : f32 to vector<64x128xf32>
    %58 = arith.subf %56, %57 : vector<64x128xf32>
    %59 = vector.extract_strided_slice %58 {offsets = [0, 0], sizes = [64, 29], strides = [1, 1]} : vector<64x128xf32> to vector<64x29xf32>
    %c1 = arith.constant 1 : index
    %c0_37 = arith.constant 0 : index
    %c0_38 = arith.constant 0 : index
    %60 = vector.load %arg4[%c1, %c0_37, %c0_38] : memref<8x64x29xf32, #tpu.memory_space<vmem>>, vector<1x64x29xf32>
    %61 = vector.shape_cast %60 : vector<1x64x29xf32> to vector<64x29xf32>
    %62 = vector.shape_cast %59 : vector<64x29xf32> to vector<1x64x29xf32>
    tpu.vector_store %arg4[%c1, %c0_37, %c0_38], %62 {strides = array<i32>} : memref<8x64x29xf32, #tpu.memory_space<vmem>>, vector<1x64x29xf32>,
    %c2_i32_39 = arith.constant 2 : i32
    %63 = arith.addi %0, %c2_i32_39 : i32
    %c0_i32_40 = arith.constant 0 : i32
    %64 = arith.addi %63, %c0_i32_40 : i32
    %65 = arith.index_cast %64 : i32 to index
    %c0_41 = arith.constant 0 : index
    %c0_42 = arith.constant 0 : index
    %66 = vector.load %arg1[%65, %c0_41, %c0_42] : memref<35x32x128xf32, #tpu.memory_space<vmem>>, vector<1x32x128xf32>
    %67 = vector.shape_cast %66 : vector<1x32x128xf32> to vector<32x128xf32>
    %c1_i32_43 = arith.constant 1 : i32
    %68 = arith.addi %63, %c1_i32_43 : i32
    %69 = arith.index_cast %68 : i32 to index
    %c0_44 = arith.constant 0 : index
    %c0_45 = arith.constant 0 : index
    %70 = vector.load %arg1[%69, %c0_44, %c0_45] : memref<35x32x128xf32, #tpu.memory_space<vmem>>, vector<1x32x128xf32>
    %71 = vector.shape_cast %70 : vector<1x32x128xf32> to vector<32x128xf32>
    %c2_i32_46 = arith.constant 2 : i32
    %72 = arith.addi %63, %c2_i32_46 : i32
    %73 = arith.index_cast %72 : i32 to index
    %c0_47 = arith.constant 0 : index
    %c0_48 = arith.constant 0 : index
    %74 = vector.load %arg1[%73, %c0_47, %c0_48] : memref<35x32x128xf32, #tpu.memory_space<vmem>>, vector<1x32x128xf32>
    %75 = vector.shape_cast %74 : vector<1x32x128xf32> to vector<32x128xf32>
    %c3_i32_49 = arith.constant 3 : i32
    %76 = arith.addi %63, %c3_i32_49 : i32
    %77 = arith.index_cast %76 : i32 to index
    %c0_50 = arith.constant 0 : index
    %c0_51 = arith.constant 0 : index
    %78 = vector.load %arg1[%77, %c0_50, %c0_51] : memref<35x32x128xf32, #tpu.memory_space<vmem>>, vector<1x32x128xf32>
    %79 = vector.shape_cast %78 : vector<1x32x128xf32> to vector<32x128xf32>
    %80 = tpu.concatenate %67, %71, %75, %79 in 0 : vector<32x128xf32>, vector<32x128xf32>, vector<32x128xf32>, vector<32x128xf32> -> vector<128x128xf32>
    %c0_52 = arith.constant 0 : index
    %c0_53 = arith.constant 0 : index
    %81 = vector.load %arg2[%c0_52, %c0_53] : memref<64x128xf32, #tpu.memory_space<vmem>>, vector<64x128xf32>
    %cst_54 = arith.constant dense<0.000000e+00> : vector<64x128xf32>
    %82 = tpu.matmul %81, %80, %cst_54 {dimension_numbers = #tpu.dot_dimension_numbers<[1], [0], [0], [1], [0, 0, 1, 1], [], []>} : vector<64x128xf32>, vector<128x128xf32>, vector<64x128xf32> -> vector<64x128xf32>
    %c0_55 = arith.constant 0 : index
    %c0_56 = arith.constant 0 : index
    %83 = vector.load %arg3[%c0_55, %c0_56] : memref<64x1xf32, #tpu.memory_space<vmem>>, vector<64x1xf32>
    %84 = vector.broadcast %83 : vector<64x1xf32> to vector<64x128xf32>
    %85 = arith.addf %82, %84 : vector<64x128xf32>
    %cst_57 = arith.constant 0.000000e+00 : f32
    %86 = vector.broadcast %cst_57 : f32 to vector<64x128xf32>
    %87 = arith.maximumf %85, %86 : vector<64x128xf32>
    %cst_58 = arith.constant 1.000000e+00 : f32
    %88 = vector.broadcast %cst_58 : f32 to vector<64x128xf32>
    %89 = arith.subf %87, %88 : vector<64x128xf32>
    %90 = vector.extract_strided_slice %89 {offsets = [0, 0], sizes = [64, 29], strides = [1, 1]} : vector<64x128xf32> to vector<64x29xf32>
    %c2 = arith.constant 2 : index
    %c0_59 = arith.constant 0 : index
    %c0_60 = arith.constant 0 : index
    %91 = vector.load %arg4[%c2, %c0_59, %c0_60] : memref<8x64x29xf32, #tpu.memory_space<vmem>>, vector<1x64x29xf32>
    %92 = vector.shape_cast %91 : vector<1x64x29xf32> to vector<64x29xf32>
    %93 = vector.shape_cast %90 : vector<64x29xf32> to vector<1x64x29xf32>
    tpu.vector_store %arg4[%c2, %c0_59, %c0_60], %93 {strides = array<i32>} : memref<8x64x29xf32, #tpu.memory_space<vmem>>, vector<1x64x29xf32>,
    %c3_i32_61 = arith.constant 3 : i32
    %94 = arith.addi %0, %c3_i32_61 : i32
    %c0_i32_62 = arith.constant 0 : i32
    %95 = arith.addi %94, %c0_i32_62 : i32
    %96 = arith.index_cast %95 : i32 to index
    %c0_63 = arith.constant 0 : index
    %c0_64 = arith.constant 0 : index
    %97 = vector.load %arg1[%96, %c0_63, %c0_64] : memref<35x32x128xf32, #tpu.memory_space<vmem>>, vector<1x32x128xf32>
    %98 = vector.shape_cast %97 : vector<1x32x128xf32> to vector<32x128xf32>
    %c1_i32_65 = arith.constant 1 : i32
    %99 = arith.addi %94, %c1_i32_65 : i32
    %100 = arith.index_cast %99 : i32 to index
    %c0_66 = arith.constant 0 : index
    %c0_67 = arith.constant 0 : index
    %101 = vector.load %arg1[%100, %c0_66, %c0_67] : memref<35x32x128xf32, #tpu.memory_space<vmem>>, vector<1x32x128xf32>
    %102 = vector.shape_cast %101 : vector<1x32x128xf32> to vector<32x128xf32>
    %c2_i32_68 = arith.constant 2 : i32
    %103 = arith.addi %94, %c2_i32_68 : i32
    %104 = arith.index_cast %103 : i32 to index
    %c0_69 = arith.constant 0 : index
    %c0_70 = arith.constant 0 : index
    %105 = vector.load %arg1[%104, %c0_69, %c0_70] : memref<35x32x128xf32, #tpu.memory_space<vmem>>, vector<1x32x128xf32>
    %106 = vector.shape_cast %105 : vector<1x32x128xf32> to vector<32x128xf32>
    %c3_i32_71 = arith.constant 3 : i32
    %107 = arith.addi %94, %c3_i32_71 : i32
    %108 = arith.index_cast %107 : i32 to index
    %c0_72 = arith.constant 0 : index
    %c0_73 = arith.constant 0 : index
    %109 = vector.load %arg1[%108, %c0_72, %c0_73] : memref<35x32x128xf32, #tpu.memory_space<vmem>>, vector<1x32x128xf32>
    %110 = vector.shape_cast %109 : vector<1x32x128xf32> to vector<32x128xf32>
    %111 = tpu.concatenate %98, %102, %106, %110 in 0 : vector<32x128xf32>, vector<32x128xf32>, vector<32x128xf32>, vector<32x128xf32> -> vector<128x128xf32>
    %c0_74 = arith.constant 0 : index
    %c0_75 = arith.constant 0 : index
    %112 = vector.load %arg2[%c0_74, %c0_75] : memref<64x128xf32, #tpu.memory_space<vmem>>, vector<64x128xf32>
    %cst_76 = arith.constant dense<0.000000e+00> : vector<64x128xf32>
    %113 = tpu.matmul %112, %111, %cst_76 {dimension_numbers = #tpu.dot_dimension_numbers<[1], [0], [0], [1], [0, 0, 1, 1], [], []>} : vector<64x128xf32>, vector<128x128xf32>, vector<64x128xf32> -> vector<64x128xf32>
    %c0_77 = arith.constant 0 : index
    %c0_78 = arith.constant 0 : index
    %114 = vector.load %arg3[%c0_77, %c0_78] : memref<64x1xf32, #tpu.memory_space<vmem>>, vector<64x1xf32>
    %115 = vector.broadcast %114 : vector<64x1xf32> to vector<64x128xf32>
    %116 = arith.addf %113, %115 : vector<64x128xf32>
    %cst_79 = arith.constant 0.000000e+00 : f32
    %117 = vector.broadcast %cst_79 : f32 to vector<64x128xf32>
    %118 = arith.maximumf %116, %117 : vector<64x128xf32>
    %cst_80 = arith.constant 1.000000e+00 : f32
    %119 = vector.broadcast %cst_80 : f32 to vector<64x128xf32>
    %120 = arith.subf %118, %119 : vector<64x128xf32>
    %121 = vector.extract_strided_slice %120 {offsets = [0, 0], sizes = [64, 29], strides = [1, 1]} : vector<64x128xf32> to vector<64x29xf32>
    %c3 = arith.constant 3 : index
    %c0_81 = arith.constant 0 : index
    %c0_82 = arith.constant 0 : index
    %122 = vector.load %arg4[%c3, %c0_81, %c0_82] : memref<8x64x29xf32, #tpu.memory_space<vmem>>, vector<1x64x29xf32>
    %123 = vector.shape_cast %122 : vector<1x64x29xf32> to vector<64x29xf32>
    %124 = vector.shape_cast %121 : vector<64x29xf32> to vector<1x64x29xf32>
    tpu.vector_store %arg4[%c3, %c0_81, %c0_82], %124 {strides = array<i32>} : memref<8x64x29xf32, #tpu.memory_space<vmem>>, vector<1x64x29xf32>,
    %c4_i32 = arith.constant 4 : i32
    %125 = arith.addi %0, %c4_i32 : i32
    %c0_i32_83 = arith.constant 0 : i32
    %126 = arith.addi %125, %c0_i32_83 : i32
    %127 = arith.index_cast %126 : i32 to index
    %c0_84 = arith.constant 0 : index
    %c0_85 = arith.constant 0 : index
    %128 = vector.load %arg1[%127, %c0_84, %c0_85] : memref<35x32x128xf32, #tpu.memory_space<vmem>>, vector<1x32x128xf32>
    %129 = vector.shape_cast %128 : vector<1x32x128xf32> to vector<32x128xf32>
    %c1_i32_86 = arith.constant 1 : i32
    %130 = arith.addi %125, %c1_i32_86 : i32
    %131 = arith.index_cast %130 : i32 to index
    %c0_87 = arith.constant 0 : index
    %c0_88 = arith.constant 0 : index
    %132 = vector.load %arg1[%131, %c0_87, %c0_88] : memref<35x32x128xf32, #tpu.memory_space<vmem>>, vector<1x32x128xf32>
    %133 = vector.shape_cast %132 : vector<1x32x128xf32> to vector<32x128xf32>
    %c2_i32_89 = arith.constant 2 : i32
    %134 = arith.addi %125, %c2_i32_89 : i32
    %135 = arith.index_cast %134 : i32 to index
    %c0_90 = arith.constant 0 : index
    %c0_91 = arith.constant 0 : index
    %136 = vector.load %arg1[%135, %c0_90, %c0_91] : memref<35x32x128xf32, #tpu.memory_space<vmem>>, vector<1x32x128xf32>
    %137 = vector.shape_cast %136 : vector<1x32x128xf32> to vector<32x128xf32>
    %c3_i32_92 = arith.constant 3 : i32
    %138 = arith.addi %125, %c3_i32_92 : i32
    %139 = arith.index_cast %138 : i32 to index
    %c0_93 = arith.constant 0 : index
    %c0_94 = arith.constant 0 : index
    %140 = vector.load %arg1[%139, %c0_93, %c0_94] : memref<35x32x128xf32, #tpu.memory_space<vmem>>, vector<1x32x128xf32>
    %141 = vector.shape_cast %140 : vector<1x32x128xf32> to vector<32x128xf32>
    %142 = tpu.concatenate %129, %133, %137, %141 in 0 : vector<32x128xf32>, vector<32x128xf32>, vector<32x128xf32>, vector<32x128xf32> -> vector<128x128xf32>
    %c0_95 = arith.constant 0 : index
    %c0_96 = arith.constant 0 : index
    %143 = vector.load %arg2[%c0_95, %c0_96] : memref<64x128xf32, #tpu.memory_space<vmem>>, vector<64x128xf32>
    %cst_97 = arith.constant dense<0.000000e+00> : vector<64x128xf32>
    %144 = tpu.matmul %143, %142, %cst_97 {dimension_numbers = #tpu.dot_dimension_numbers<[1], [0], [0], [1], [0, 0, 1, 1], [], []>} : vector<64x128xf32>, vector<128x128xf32>, vector<64x128xf32> -> vector<64x128xf32>
    %c0_98 = arith.constant 0 : index
    %c0_99 = arith.constant 0 : index
    %145 = vector.load %arg3[%c0_98, %c0_99] : memref<64x1xf32, #tpu.memory_space<vmem>>, vector<64x1xf32>
    %146 = vector.broadcast %145 : vector<64x1xf32> to vector<64x128xf32>
    %147 = arith.addf %144, %146 : vector<64x128xf32>
    %cst_100 = arith.constant 0.000000e+00 : f32
    %148 = vector.broadcast %cst_100 : f32 to vector<64x128xf32>
    %149 = arith.maximumf %147, %148 : vector<64x128xf32>
    %cst_101 = arith.constant 1.000000e+00 : f32
    %150 = vector.broadcast %cst_101 : f32 to vector<64x128xf32>
    %151 = arith.subf %149, %150 : vector<64x128xf32>
    %152 = vector.extract_strided_slice %151 {offsets = [0, 0], sizes = [64, 29], strides = [1, 1]} : vector<64x128xf32> to vector<64x29xf32>
    %c4 = arith.constant 4 : index
    %c0_102 = arith.constant 0 : index
    %c0_103 = arith.constant 0 : index
    %153 = vector.load %arg4[%c4, %c0_102, %c0_103] : memref<8x64x29xf32, #tpu.memory_space<vmem>>, vector<1x64x29xf32>
    %154 = vector.shape_cast %153 : vector<1x64x29xf32> to vector<64x29xf32>
    %155 = vector.shape_cast %152 : vector<64x29xf32> to vector<1x64x29xf32>
    tpu.vector_store %arg4[%c4, %c0_102, %c0_103], %155 {strides = array<i32>} : memref<8x64x29xf32, #tpu.memory_space<vmem>>, vector<1x64x29xf32>,
    %c5_i32 = arith.constant 5 : i32
    %156 = arith.addi %0, %c5_i32 : i32
    %c0_i32_104 = arith.constant 0 : i32
    %157 = arith.addi %156, %c0_i32_104 : i32
    %158 = arith.index_cast %157 : i32 to index
    %c0_105 = arith.constant 0 : index
    %c0_106 = arith.constant 0 : index
    %159 = vector.load %arg1[%158, %c0_105, %c0_106] : memref<35x32x128xf32, #tpu.memory_space<vmem>>, vector<1x32x128xf32>
    %160 = vector.shape_cast %159 : vector<1x32x128xf32> to vector<32x128xf32>
    %c1_i32_107 = arith.constant 1 : i32
    %161 = arith.addi %156, %c1_i32_107 : i32
    %162 = arith.index_cast %161 : i32 to index
    %c0_108 = arith.constant 0 : index
    %c0_109 = arith.constant 0 : index
    %163 = vector.load %arg1[%162, %c0_108, %c0_109] : memref<35x32x128xf32, #tpu.memory_space<vmem>>, vector<1x32x128xf32>
    %164 = vector.shape_cast %163 : vector<1x32x128xf32> to vector<32x128xf32>
    %c2_i32_110 = arith.constant 2 : i32
    %165 = arith.addi %156, %c2_i32_110 : i32
    %166 = arith.index_cast %165 : i32 to index
    %c0_111 = arith.constant 0 : index
    %c0_112 = arith.constant 0 : index
    %167 = vector.load %arg1[%166, %c0_111, %c0_112] : memref<35x32x128xf32, #tpu.memory_space<vmem>>, vector<1x32x128xf32>
    %168 = vector.shape_cast %167 : vector<1x32x128xf32> to vector<32x128xf32>
    %c3_i32_113 = arith.constant 3 : i32
    %169 = arith.addi %156, %c3_i32_113 : i32
    %170 = arith.index_cast %169 : i32 to index
    %c0_114 = arith.constant 0 : index
    %c0_115 = arith.constant 0 : index
    %171 = vector.load %arg1[%170, %c0_114, %c0_115] : memref<35x32x128xf32, #tpu.memory_space<vmem>>, vector<1x32x128xf32>
    %172 = vector.shape_cast %171 : vector<1x32x128xf32> to vector<32x128xf32>
    %173 = tpu.concatenate %160, %164, %168, %172 in 0 : vector<32x128xf32>, vector<32x128xf32>, vector<32x128xf32>, vector<32x128xf32> -> vector<128x128xf32>
    %c0_116 = arith.constant 0 : index
    %c0_117 = arith.constant 0 : index
    %174 = vector.load %arg2[%c0_116, %c0_117] : memref<64x128xf32, #tpu.memory_space<vmem>>, vector<64x128xf32>
    %cst_118 = arith.constant dense<0.000000e+00> : vector<64x128xf32>
    %175 = tpu.matmul %174, %173, %cst_118 {dimension_numbers = #tpu.dot_dimension_numbers<[1], [0], [0], [1], [0, 0, 1, 1], [], []>} : vector<64x128xf32>, vector<128x128xf32>, vector<64x128xf32> -> vector<64x128xf32>
    %c0_119 = arith.constant 0 : index
    %c0_120 = arith.constant 0 : index
    %176 = vector.load %arg3[%c0_119, %c0_120] : memref<64x1xf32, #tpu.memory_space<vmem>>, vector<64x1xf32>
    %177 = vector.broadcast %176 : vector<64x1xf32> to vector<64x128xf32>
    %178 = arith.addf %175, %177 : vector<64x128xf32>
    %cst_121 = arith.constant 0.000000e+00 : f32
    %179 = vector.broadcast %cst_121 : f32 to vector<64x128xf32>
    %180 = arith.maximumf %178, %179 : vector<64x128xf32>
    %cst_122 = arith.constant 1.000000e+00 : f32
    %181 = vector.broadcast %cst_122 : f32 to vector<64x128xf32>
    %182 = arith.subf %180, %181 : vector<64x128xf32>
    %183 = vector.extract_strided_slice %182 {offsets = [0, 0], sizes = [64, 29], strides = [1, 1]} : vector<64x128xf32> to vector<64x29xf32>
    %c5 = arith.constant 5 : index
    %c0_123 = arith.constant 0 : index
    %c0_124 = arith.constant 0 : index
    %184 = vector.load %arg4[%c5, %c0_123, %c0_124] : memref<8x64x29xf32, #tpu.memory_space<vmem>>, vector<1x64x29xf32>
    %185 = vector.shape_cast %184 : vector<1x64x29xf32> to vector<64x29xf32>
    %186 = vector.shape_cast %183 : vector<64x29xf32> to vector<1x64x29xf32>
    tpu.vector_store %arg4[%c5, %c0_123, %c0_124], %186 {strides = array<i32>} : memref<8x64x29xf32, #tpu.memory_space<vmem>>, vector<1x64x29xf32>,
    %c6_i32 = arith.constant 6 : i32
    %187 = arith.addi %0, %c6_i32 : i32
    %c0_i32_125 = arith.constant 0 : i32
    %188 = arith.addi %187, %c0_i32_125 : i32
    %189 = arith.index_cast %188 : i32 to index
    %c0_126 = arith.constant 0 : index
    %c0_127 = arith.constant 0 : index
    %190 = vector.load %arg1[%189, %c0_126, %c0_127] : memref<35x32x128xf32, #tpu.memory_space<vmem>>, vector<1x32x128xf32>
    %191 = vector.shape_cast %190 : vector<1x32x128xf32> to vector<32x128xf32>
    %c1_i32_128 = arith.constant 1 : i32
    %192 = arith.addi %187, %c1_i32_128 : i32
    %193 = arith.index_cast %192 : i32 to index
    %c0_129 = arith.constant 0 : index
    %c0_130 = arith.constant 0 : index
    %194 = vector.load %arg1[%193, %c0_129, %c0_130] : memref<35x32x128xf32, #tpu.memory_space<vmem>>, vector<1x32x128xf32>
    %195 = vector.shape_cast %194 : vector<1x32x128xf32> to vector<32x128xf32>
    %c2_i32_131 = arith.constant 2 : i32
    %196 = arith.addi %187, %c2_i32_131 : i32
    %197 = arith.index_cast %196 : i32 to index
    %c0_132 = arith.constant 0 : index
    %c0_133 = arith.constant 0 : index
    %198 = vector.load %arg1[%197, %c0_132, %c0_133] : memref<35x32x128xf32, #tpu.memory_space<vmem>>, vector<1x32x128xf32>
    %199 = vector.shape_cast %198 : vector<1x32x128xf32> to vector<32x128xf32>
    %c3_i32_134 = arith.constant 3 : i32
    %200 = arith.addi %187, %c3_i32_134 : i32
    %201 = arith.index_cast %200 : i32 to index
    %c0_135 = arith.constant 0 : index
    %c0_136 = arith.constant 0 : index
    %202 = vector.load %arg1[%201, %c0_135, %c0_136] : memref<35x32x128xf32, #tpu.memory_space<vmem>>, vector<1x32x128xf32>
    %203 = vector.shape_cast %202 : vector<1x32x128xf32> to vector<32x128xf32>
    %204 = tpu.concatenate %191, %195, %199, %203 in 0 : vector<32x128xf32>, vector<32x128xf32>, vector<32x128xf32>, vector<32x128xf32> -> vector<128x128xf32>
    %c0_137 = arith.constant 0 : index
    %c0_138 = arith.constant 0 : index
    %205 = vector.load %arg2[%c0_137, %c0_138] : memref<64x128xf32, #tpu.memory_space<vmem>>, vector<64x128xf32>
    %cst_139 = arith.constant dense<0.000000e+00> : vector<64x128xf32>
    %206 = tpu.matmul %205, %204, %cst_139 {dimension_numbers = #tpu.dot_dimension_numbers<[1], [0], [0], [1], [0, 0, 1, 1], [], []>} : vector<64x128xf32>, vector<128x128xf32>, vector<64x128xf32> -> vector<64x128xf32>
    %c0_140 = arith.constant 0 : index
    %c0_141 = arith.constant 0 : index
    %207 = vector.load %arg3[%c0_140, %c0_141] : memref<64x1xf32, #tpu.memory_space<vmem>>, vector<64x1xf32>
    %208 = vector.broadcast %207 : vector<64x1xf32> to vector<64x128xf32>
    %209 = arith.addf %206, %208 : vector<64x128xf32>
    %cst_142 = arith.constant 0.000000e+00 : f32
    %210 = vector.broadcast %cst_142 : f32 to vector<64x128xf32>
    %211 = arith.maximumf %209, %210 : vector<64x128xf32>
    %cst_143 = arith.constant 1.000000e+00 : f32
    %212 = vector.broadcast %cst_143 : f32 to vector<64x128xf32>
    %213 = arith.subf %211, %212 : vector<64x128xf32>
    %214 = vector.extract_strided_slice %213 {offsets = [0, 0], sizes = [64, 29], strides = [1, 1]} : vector<64x128xf32> to vector<64x29xf32>
    %c6 = arith.constant 6 : index
    %c0_144 = arith.constant 0 : index
    %c0_145 = arith.constant 0 : index
    %215 = vector.load %arg4[%c6, %c0_144, %c0_145] : memref<8x64x29xf32, #tpu.memory_space<vmem>>, vector<1x64x29xf32>
    %216 = vector.shape_cast %215 : vector<1x64x29xf32> to vector<64x29xf32>
    %217 = vector.shape_cast %214 : vector<64x29xf32> to vector<1x64x29xf32>
    tpu.vector_store %arg4[%c6, %c0_144, %c0_145], %217 {strides = array<i32>} : memref<8x64x29xf32, #tpu.memory_space<vmem>>, vector<1x64x29xf32>,
    %c7_i32 = arith.constant 7 : i32
    %218 = arith.addi %0, %c7_i32 : i32
    %c0_i32_146 = arith.constant 0 : i32
    %219 = arith.addi %218, %c0_i32_146 : i32
    %220 = arith.index_cast %219 : i32 to index
    %c0_147 = arith.constant 0 : index
    %c0_148 = arith.constant 0 : index
    %221 = vector.load %arg1[%220, %c0_147, %c0_148] : memref<35x32x128xf32, #tpu.memory_space<vmem>>, vector<1x32x128xf32>
    %222 = vector.shape_cast %221 : vector<1x32x128xf32> to vector<32x128xf32>
    %c1_i32_149 = arith.constant 1 : i32
    %223 = arith.addi %218, %c1_i32_149 : i32
    %224 = arith.index_cast %223 : i32 to index
    %c0_150 = arith.constant 0 : index
    %c0_151 = arith.constant 0 : index
    %225 = vector.load %arg1[%224, %c0_150, %c0_151] : memref<35x32x128xf32, #tpu.memory_space<vmem>>, vector<1x32x128xf32>
    %226 = vector.shape_cast %225 : vector<1x32x128xf32> to vector<32x128xf32>
    %c2_i32_152 = arith.constant 2 : i32
    %227 = arith.addi %218, %c2_i32_152 : i32
    %228 = arith.index_cast %227 : i32 to index
    %c0_153 = arith.constant 0 : index
    %c0_154 = arith.constant 0 : index
    %229 = vector.load %arg1[%228, %c0_153, %c0_154] : memref<35x32x128xf32, #tpu.memory_space<vmem>>, vector<1x32x128xf32>
    %230 = vector.shape_cast %229 : vector<1x32x128xf32> to vector<32x128xf32>
    %c3_i32_155 = arith.constant 3 : i32
    %231 = arith.addi %218, %c3_i32_155 : i32
    %232 = arith.index_cast %231 : i32 to index
    %c0_156 = arith.constant 0 : index
    %c0_157 = arith.constant 0 : index
    %233 = vector.load %arg1[%232, %c0_156, %c0_157] : memref<35x32x128xf32, #tpu.memory_space<vmem>>, vector<1x32x128xf32>
    %234 = vector.shape_cast %233 : vector<1x32x128xf32> to vector<32x128xf32>
    %235 = tpu.concatenate %222, %226, %230, %234 in 0 : vector<32x128xf32>, vector<32x128xf32>, vector<32x128xf32>, vector<32x128xf32> -> vector<128x128xf32>
    %c0_158 = arith.constant 0 : index
    %c0_159 = arith.constant 0 : index
    %236 = vector.load %arg2[%c0_158, %c0_159] : memref<64x128xf32, #tpu.memory_space<vmem>>, vector<64x128xf32>
    %cst_160 = arith.constant dense<0.000000e+00> : vector<64x128xf32>
    %237 = tpu.matmul %236, %235, %cst_160 {dimension_numbers = #tpu.dot_dimension_numbers<[1], [0], [0], [1], [0, 0, 1, 1], [], []>} : vector<64x128xf32>, vector<128x128xf32>, vector<64x128xf32> -> vector<64x128xf32>
    %c0_161 = arith.constant 0 : index
    %c0_162 = arith.constant 0 : index
    %238 = vector.load %arg3[%c0_161, %c0_162] : memref<64x1xf32, #tpu.memory_space<vmem>>, vector<64x1xf32>
    %239 = vector.broadcast %238 : vector<64x1xf32> to vector<64x128xf32>
    %240 = arith.addf %237, %239 : vector<64x128xf32>
    %cst_163 = arith.constant 0.000000e+00 : f32
    %241 = vector.broadcast %cst_163 : f32 to vector<64x128xf32>
    %242 = arith.maximumf %240, %241 : vector<64x128xf32>
    %cst_164 = arith.constant 1.000000e+00 : f32
    %243 = vector.broadcast %cst_164 : f32 to vector<64x128xf32>
    %244 = arith.subf %242, %243 : vector<64x128xf32>
    %245 = vector.extract_strided_slice %244 {offsets = [0, 0], sizes = [64, 29], strides = [1, 1]} : vector<64x128xf32> to vector<64x29xf32>
    %c7 = arith.constant 7 : index
    %c0_165 = arith.constant 0 : index
    %c0_166 = arith.constant 0 : index
    %246 = vector.load %arg4[%c7, %c0_165, %c0_166] : memref<8x64x29xf32, #tpu.memory_space<vmem>>, vector<1x64x29xf32>
    %247 = vector.shape_cast %246 : vector<1x64x29xf32> to vector<64x29xf32>
    %248 = vector.shape_cast %245 : vector<64x29xf32> to vector<1x64x29xf32>
    tpu.vector_store %arg4[%c7, %c0_165, %c0_166], %248 {strides = array<i32>} : memref<8x64x29xf32, #tpu.memory_space<vmem>>, vector<1x64x29xf32>,
    return
  }
  func.func @transform_0(%arg0: i32) -> (i32, i32, i32) {
    %c0_i32 = arith.constant 0 : i32
    %c0_i32_0 = arith.constant 0 : i32
    %c0_i32_1 = arith.constant 0 : i32
    %c0_i32_2 = arith.constant 0 : i32
    return %c0_i32, %c0_i32_0, %c0_i32_1 : i32, i32, i32
  }
  func.func @transform_1(%arg0: i32) -> (i32, i32) {
    %c0_i32 = arith.constant 0 : i32
    %c0_i32_0 = arith.constant 0 : i32
    %c0_i32_1 = arith.constant 0 : i32
    return %c0_i32, %c0_i32_0 : i32, i32
  }
  func.func @transform_2(%arg0: i32) -> (i32, i32) {
    %c0_i32 = arith.constant 0 : i32
    %c0_i32_0 = arith.constant 0 : i32
    %c0_i32_1 = arith.constant 0 : i32
    return %c0_i32, %c0_i32_0 : i32, i32
  }
  func.func @transform_3(%arg0: i32) -> (i32, i32, i32) {
    %c0_i32 = arith.constant 0 : i32
    %c0_i32_0 = arith.constant 0 : i32
    %c0_i32_1 = arith.constant 0 : i32
    return %arg0, %c0_i32, %c0_i32_0 : i32, i32, i32
  }
}

</mosaic_0001>

<llo_original>
// kernel: model_forward.1
$region0: #{model_forward.1}
  #allocation0 [shape = 'u32[]', space=smem, size = 0x4, offset = 0x4, fixed_abs, tag = 'smem constant byte address 0x4 - core index']
  #allocation1 [shape = 'u32[144,128]{1,0:T(1,128)}', space=vmem, size = 0x12000, scoped, tag = 'internal scratch']
  %s0 = inlined_call_operand.vmem [shape: f32[35,32,128], index: 0, kind: input, shape index: {}]
  %s1 = inlined_call_operand.vmem [shape: f32[64,128], index: 1, kind: input, shape index: {}]
  %s2 = inlined_call_operand.vmem [shape: f32[64,1], index: 2, kind: input, shape index: {}]
  %s3 = inlined_call_operand.vmem [shape: f32[32,64,29], index: 3, kind: output, shape index: {}]
  %s4 = sld [smem:[#allocation0]]
  $region45: #{model_forward.1} parent=0
    _
  %s6 = ssub.s32 1, %s4
  %s7 = scalar_select 0, %s6, %s4
  loop: start=0, step=1, limit=6
  $region2: #{model_forward.1} parent=0 // loop_pre_header
    _
  $region3: #{model_forward.1} parent=0 // loop_header
    %s9 = sphi 0, %s13
    %p10 = scmp.ge.s32.totalorder %s9, 6
    %s17 = sphi 0, %s17
    %s19 = sphi 0, %s17
    %s20 = sphi 0, %s19
    %s34 = sphi 0, %s20
    %s38 = sphi 0, %s38
    %s40 = sphi 0, %s38
    %s41 = sphi 0, %s40
    %s55 = sphi 0, %s41
    %s59 = sphi 0, %s59
    %s61 = sphi 0, %s59
    %s62 = sphi 0, %s61
    %s76 = sphi 0, %s62
    %s82 = sphi 0, %s84
    %s85 = sphi 0, %s82
    %s86 = sphi 0, %s85
    %s102 = sphi 0, %s86
  $region4: #{model_forward.1} parent=0 // loop_header_branch
    %12 = sbr.rel (%p10) target = $region8
  $region5: #{model_forward.1} parent=0 // loop_body
    %s14 = ssub.s32 %s9, 1
    %s15 = ssub.s32 %s9, 2
    %s16 = sadd.s32 %s9, 1
    %s18 = sadd.s32 %s17, 1
    %p21 = scmp.eq.s32.totalorder %s9, 3
    %p22 = scmp.ne.s32.totalorder %s17, %s19
    %p23 = scmp.eq.s32.totalorder %s9, 0
    %p24 = por %p22, %p23
    %p25 = scmp.ne.s32.totalorder %s17, %s19
    %p26 = scmp.eq.s32.totalorder %s14, 3
    %p27 = por %p25, %p26
    %p28 = scmp.ne.s32.totalorder %s19, %s20
    %p29 = scmp.eq.s32.totalorder %s14, 0
    %p30 = por %p28, %p29
    %p31 = scmp.ne.s32.totalorder %s19, %s20
    %p32 = scmp.eq.s32.totalorder %s15, 3
    %p33 = por %p31, %p32
    %p35 = scmp.ne.s32.totalorder %s20, %s34
    %p36 = scmp.eq.s32.totalorder %s15, 0
    %p37 = por %p35, %p36
    %s39 = sadd.s32 %s38, 1
    %p42 = scmp.eq.s32.totalorder %s9, 3
    %p43 = scmp.ne.s32.totalorder %s38, %s40
    %p44 = scmp.eq.s32.totalorder %s9, 0
    %p45 = por %p43, %p44
    %p46 = scmp.ne.s32.totalorder %s38, %s40
    %p47 = scmp.eq.s32.totalorder %s14, 3
    %p48 = por %p46, %p47
    %p49 = scmp.ne.s32.totalorder %s40, %s41
    %p50 = scmp.eq.s32.totalorder %s14, 0
    %p51 = por %p49, %p50
    %p52 = scmp.ne.s32.totalorder %s40, %s41
    %p53 = scmp.eq.s32.totalorder %s15, 3
    %p54 = por %p52, %p53
    %p56 = scmp.ne.s32.totalorder %s41, %s55
    %p57 = scmp.eq.s32.totalorder %s15, 0
    %p58 = por %p56, %p57
    %s60 = sadd.s32 %s59, 1
    %p63 = scmp.eq.s32.totalorder %s9, 3
    %p64 = scmp.ne.s32.totalorder %s59, %s61
    %p65 = scmp.eq.s32.totalorder %s9, 0
    %p66 = por %p64, %p65
    %p67 = scmp.ne.s32.totalorder %s59, %s61
    %p68 = scmp.eq.s32.totalorder %s14, 3
    %p69 = por %p67, %p68
    %p70 = scmp.ne.s32.totalorder %s61, %s62
    %p71 = scmp.eq.s32.totalorder %s14, 0
    %p72 = por %p70, %p71
    %p73 = scmp.ne.s32.totalorder %s61, %s62
    %p74 = scmp.eq.s32.totalorder %s15, 3
    %p75 = por %p73, %p74
    %p77 = scmp.ne.s32.totalorder %s62, %s76
    %p78 = scmp.eq.s32.totalorder %s15, 0
    %p79 = por %p77, %p78
    %s80 = ssub.s32 %s9, %s16
    %p81 = scmp.eq.s32.totalorder %s80, 0
    %s83 = sadd.s32 %s82, 1
    %s84 = scalar_select %p81, %s82, %s83
    %p87 = pneg %p81
    %p88 = scmp.eq.s32.totalorder %s9, 3
    %p89 = por %p87, %p88
    %p90 = scmp.ne.s32.totalorder %s82, %s85
    %p91 = scmp.eq.s32.totalorder %s9, 0
    %p92 = por %p90, %p91
    %p93 = scmp.ne.s32.totalorder %s82, %s85
    %p94 = scmp.eq.s32.totalorder %s14, 3
    %p95 = por %p93, %p94
    %p96 = scmp.ne.s32.totalorder %s85, %s86
    %p97 = scmp.eq.s32.totalorder %s14, 0
    %p98 = por %p96, %p97
    %p99 = scmp.ne.s32.totalorder %s85, %s86
    %p100 = scmp.eq.s32.totalorder %s15, 3
    %p101 = por %p99, %p100
    %p103 = scmp.ne.s32.totalorder %s86, %s102
    %p104 = scmp.eq.s32.totalorder %s15, 0
    %p105 = por %p103, %p104
    %p106 = scmp.le.s32.totalorder 1, %s9
    %p107 = scmp.lt.s32.totalorder %s9, 5
    %p108 = pnand %p106, %p107
    %p109 = pneg %p108
    // Predicated region
    $region9: #{model_forward.1} parent=5 // pred_check
      _
    $region10: #{model_forward.1} parent=5 // pred_check_branch
      %111 = sbr.rel (%p108) target = $region12
    $region11: #{model_forward.1} parent=5 // pred_region
      %s112 = ssub.s32 %s9, 1
      // Predicated region
      $region13: #{model_forward.1} parent=11 // pred_check
        %p113 = pneg %p30
      $region14: #{model_forward.1} parent=11 // pred_check_branch
        %115 = sbr.rel (%p113) target = $region16
      $region15: #{model_forward.1} parent=11 // pred_region
        _
      $region16: #{model_forward.1} parent=11 // pred_fallthru
        _
      // Predicated region
      $region17: #{model_forward.1} parent=11 // pred_check
        %p116 = pneg %p51
      $region18: #{model_forward.1} parent=11 // pred_check_branch
        %118 = sbr.rel (%p116) target = $region20
      $region19: #{model_forward.1} parent=11 // pred_region
        _
      $region20: #{model_forward.1} parent=11 // pred_fallthru
        _
      // Predicated region
      $region21: #{model_forward.1} parent=11 // pred_check
        %p119 = pneg %p72
      $region22: #{model_forward.1} parent=11 // pred_check_branch
        %121 = sbr.rel (%p119) target = $region24
      $region23: #{model_forward.1} parent=11 // pred_region
        _
      $region24: #{model_forward.1} parent=11 // pred_fallthru
        _
    $region12: #{model_forward.1} parent=5 // pred_fallthru
      _
    %p122 = scmp.lt.s32.totalorder %s9, 4
    // Predicated region
    $region25: #{model_forward.1} parent=5 // pred_check
      %p123 = pneg %p122
    $region26: #{model_forward.1} parent=5 // pred_check_branch
      %125 = sbr.rel (%p123) target = $region28
    $region27: #{model_forward.1} parent=5 // pred_region
      _
    $region28: #{model_forward.1} parent=5 // pred_fallthru
      _
    %p126 = scmp.le.s32.totalorder 1, %s9
    %p127 = scmp.lt.s32.totalorder %s9, 5
    %p128 = pnand %p126, %p127
    %p129 = pneg %p128
    // Predicated region
    $region29: #{model_forward.1} parent=5 // pred_check
      _
    $region30: #{model_forward.1} parent=5 // pred_check_branch
      %131 = sbr.rel (%p128) target = $region32
    $region31: #{model_forward.1} parent=5 // pred_region
      %s132 = ssub.s32 %s9, 1
      %p133 = pneg %p30
      %p134 = pneg %p27
      %p135 = pneg %p51
      %p136 = pneg %p48
      %p137 = pneg %p72
      %p138 = pneg %p69
      %p139 = pneg %p98
      %p140 = pneg %p95
      %s141 = smul.u32 8, %s14
      %p142 = scmp.lt.s32.totalorder %s141, 31
      %s143 = scalar_select %p142, %s141, 31
      %s144 = smul.addr %s143, 8
      %s145 = smul.addr %s144, 8
      %s146 = scalar_lea.vmem %s3, %s145
      %s147 = smul.u32 8, %s14
      %p148 = scmp.lt.s32.totalorder %s147, 31
      %s149 = scalar_select %p148, %s147, 31
      %s150 = smul.addr %s149, 8
      %s151 = smul.addr %s150, 8
      %s152 = scalar_lea.vmem %s3, %s151
      %s153 = smul.u32 8, %s14
      %s154 = smul.u32 %s14, 8
      %s155 = smul.u32 %s154, 32
      %s156 = scalar_lea.vmem %s0, %s155
      %v157 = vld [vmem:[%s156] sm:$0xff]
      %v158 = vld [vmem:[%s156 + $0x8] sm:$0xff]
      %v159 = vld [vmem:[%s156 + $0x10] sm:$0xff]
      %v160 = vld [vmem:[%s156 + $0x18] sm:$0xff]
      %s161 = sadd.s32 %s154, 1
      %s162 = smul.u32 %s161, 32
      %s163 = scalar_lea.vmem %s0, %s162
      %v164 = vld [vmem:[%s163] sm:$0xff]
      %v165 = vld [vmem:[%s163 + $0x8] sm:$0xff]
      %v166 = vld [vmem:[%s163 + $0x10] sm:$0xff]
      %v167 = vld [vmem:[%s163 + $0x18] sm:$0xff]
      %s168 = sadd.s32 %s154, 2
      %s169 = smul.u32 %s168, 32
      %s170 = scalar_lea.vmem %s0, %s169
      %v171 = vld [vmem:[%s170] sm:$0xff]
      %v172 = vld [vmem:[%s170 + $0x8] sm:$0xff]
      %v173 = vld [vmem:[%s170 + $0x10] sm:$0xff]
      %v174 = vld [vmem:[%s170 + $0x18] sm:$0xff]
      %s175 = sadd.s32 %s154, 3
      %s176 = smul.u32 %s175, 32
      %s177 = scalar_lea.vmem %s0, %s176
      %v178 = vld [vmem:[%s177] sm:$0xff]
      %v179 = vld [vmem:[%s177 + $0x8] sm:$0xff]
      %v180 = vld [vmem:[%s177 + $0x10] sm:$0xff]
      %v181 = vld [vmem:[%s177 + $0x18] sm:$0xff]
      %v182 = vld [vmem:[%s1] sm:$0xff]
      %v183 = vld [vmem:[%s1 + $0x8] sm:$0xff]
      %v184 = vld [vmem:[%s1 + $0x10] sm:$0xff]
      %v185 = vld [vmem:[%s1 + $0x18] sm:$0xff]
      %v186 = vld [vmem:[%s1 + $0x20] sm:$0xff]
      %v187 = vld [vmem:[%s1 + $0x28] sm:$0xff]
      %v188 = vld [vmem:[%s1 + $0x30] sm:$0xff]
      %v189 = vld [vmem:[%s1 + $0x38] sm:$0xff]
      %v190 = vld [vmem:[%s2] sm:$0xff]
      %v191 = vld [vmem:[%s2 + $0x8] sm:$0xff]
      %v192 = vld [vmem:[%s2 + $0x10] sm:$0xff]
      %v193 = vld [vmem:[%s2 + $0x18] sm:$0xff]
      %v194 = vld [vmem:[%s2 + $0x20] sm:$0xff]
      %v195 = vld [vmem:[%s2 + $0x28] sm:$0xff]
      %v196 = vld [vmem:[%s2 + $0x30] sm:$0xff]
      %v197 = vld [vmem:[%s2 + $0x38] sm:$0xff]
      %199 = vset.pattern.permute.xlu0 0
      %200 = vperm.xlu0 %199, %v190
      %v201 = vpop.permute.xlu0 %200
      %204 = vset.pattern.permute.xlu0 0
      %205 = vperm.xlu0 %204, %v191
      %v206 = vpop.permute.xlu0 %205
      %209 = vset.pattern.permute.xlu0 0
      %210 = vperm.xlu0 %209, %v192
      %v211 = vpop.permute.xlu0 %210
      %214 = vset.pattern.permute.xlu0 0
      %215 = vperm.xlu0 %214, %v193
      %v216 = vpop.permute.xlu0 %215
      %219 = vset.pattern.permute.xlu0 0
      %220 = vperm.xlu0 %219, %v194
      %v221 = vpop.permute.xlu0 %220
      %224 = vset.pattern.permute.xlu0 0
      %225 = vperm.xlu0 %224, %v195
      %v226 = vpop.permute.xlu0 %225
      %229 = vset.pattern.permute.xlu0 0
      %230 = vperm.xlu0 %229, %v196
      %v231 = vpop.permute.xlu0 %230
      %234 = vset.pattern.permute.xlu0 0
      %235 = vperm.xlu0 %234, %v197
      %v236 = vpop.permute.xlu0 %235
      %238 = vmatprep.subr.mxu0 0.0
      %239 = vmatpush1.msra.mxu0 %v157
      %240 = vmatprep.subr.mxu0 0.0
      %241 = vmatpush1.msra.mxu0 %v158
      %242 = vmatprep.subr.mxu0 0.0
      %243 = vmatpush1.msra.mxu0 %v159
      %244 = vmatprep.subr.mxu0 0.0
      %245 = vmatpush1.msra.mxu0 %v160
      %246 = vmatprep.subr.mxu0 0.0
      %247 = vmatpush1.msra.mxu0 %v164
      %248 = vmatprep.subr.mxu0 0.0
      %249 = vmatpush1.msra.mxu0 %v165
      %250 = vmatprep.subr.mxu0 0.0
      %251 = vmatpush1.msra.mxu0 %v166
      %252 = vmatprep.subr.mxu0 0.0
      %253 = vmatpush1.msra.mxu0 %v167
      %254 = vmatprep.subr.mxu0 0.0
      %255 = vmatpush1.msra.mxu0 %v171
      %256 = vmatprep.subr.mxu0 0.0
      %257 = vmatpush1.msra.mxu0 %v172
      %258 = vmatprep.subr.mxu0 0.0
      %259 = vmatpush1.msra.mxu0 %v173
      %260 = vmatprep.subr.mxu0 0.0
      %261 = vmatpush1.msra.mxu0 %v174
      %262 = vmatprep.subr.mxu0 0.0
      %263 = vmatpush1.msra.mxu0 %v178
      %264 = vmatprep.subr.mxu0 0.0
      %265 = vmatpush1.msra.mxu0 %v179
      %266 = vmatprep.subr.mxu0 0.0
      %267 = vmatpush1.msra.mxu0 %v180
      %268 = vmatprep.subr.mxu0 0.0
      %269 = vmatpush1.msra.mxu0 %v181
      %270 = vmatprep.subr.mxu0 0.0
      %271 = vmatpush1.msra.mxu0 0.0
      %272 = vmatprep.subr.mxu0 0.0
      %273 = vmatpush1.msra.mxu0 0.0
      %274 = vmatprep.subr.mxu0 0.0
      %275 = vmatpush1.msra.mxu0 0.0
      %276 = vmatprep.subr.mxu0 0.0
      %277 = vmatpush1.msra.mxu0 0.0
      %278 = vmatprep.subr.mxu0 0.0
      %279 = vmatpush1.msra.mxu0 0.0
      %280 = vmatprep.subr.mxu0 0.0
      %281 = vmatpush1.msra.mxu0 0.0
      %282 = vmatprep.subr.mxu0 0.0
      %283 = vmatpush1.msra.mxu0 0.0
      %284 = vmatprep.subr.mxu0 0.0
      %285 = vmatpush1.msra.mxu0 0.0
      %286 = vmatprep.subr.mxu0 0.0
      %287 = vmatpush1.msra.mxu0 0.0
      %288 = vmatprep.subr.mxu0 0.0
      %289 = vmatpush1.msra.mxu0 0.0
      %290 = vmatprep.subr.mxu0 0.0
      %291 = vmatpush1.msra.mxu0 0.0
      %292 = vmatprep.subr.mxu0 0.0
      %293 = vmatpush1.msra.mxu0 0.0
      %294 = vmatprep.subr.mxu0 0.0
      %295 = vmatpush1.msra.mxu0 0.0
      %296 = vmatprep.subr.mxu0 0.0
      %297 = vmatpush1.msra.mxu0 0.0
      %298 = vmatprep.subr.mxu0 0.0
      %299 = vmatpush1.msra.mxu0 0.0
      %300 = vmatprep.subr.mxu0 0.0
      %301 = vmatpush1.msra.mxu0 0.0
      %302 = vmatprep.mubr.f32.mxu0 0.0
      %303 = vmatmul.mubr.f32.gmra.mrb[0].mxu0 %v182
      %v304 = vpop.f32.mrb[0].mxu0
      %v305 = vadd.f32 %v201, %v304
      %v306 = vpop.f32.mrb[0].mxu0
      %307 = vmatprep.mubr.f32.mxu0 0.0
      %308 = vmatmul.mubr.f32.gmra.mrb[0].mxu0 %v183
      %v309 = vpop.f32.mrb[0].mxu0
      %v310 = vadd.f32 %v206, %v309
      %v311 = vpop.f32.mrb[0].mxu0
      %312 = vmatprep.mubr.f32.mxu0 0.0
      %313 = vmatmul.mubr.f32.gmra.mrb[0].mxu0 %v184
      %v314 = vpop.f32.mrb[0].mxu0
      %v315 = vadd.f32 %v211, %v314
      %v316 = vpop.f32.mrb[0].mxu0
      %317 = vmatprep.mubr.f32.mxu0 0.0
      %318 = vmatmul.mubr.f32.gmra.mrb[0].mxu0 %v185
      %v319 = vpop.f32.mrb[0].mxu0
      %v320 = vadd.f32 %v216, %v319
      %v321 = vpop.f32.mrb[0].mxu0
      %322 = vmatprep.mubr.f32.mxu0 0.0
      %323 = vmatmul.mubr.f32.gmra.mrb[0].mxu0 %v186
      %v324 = vpop.f32.mrb[0].mxu0
      %v325 = vadd.f32 %v221, %v324
      %v326 = vpop.f32.mrb[0].mxu0
      %327 = vmatprep.mubr.f32.mxu0 0.0
      %328 = vmatmul.mubr.f32.gmra.mrb[0].mxu0 %v187
      %v329 = vpop.f32.mrb[0].mxu0
      %v330 = vadd.f32 %v226, %v329
      %v331 = vpop.f32.mrb[0].mxu0
      %332 = vmatprep.mubr.f32.mxu0 0.0
      %333 = vmatmul.mubr.f32.gmra.mrb[0].mxu0 %v188
      %v334 = vpop.f32.mrb[0].mxu0
      %v335 = vadd.f32 %v231, %v334
      %v336 = vpop.f32.mrb[0].mxu0
      %337 = vmatprep.mubr.f32.mxu0 0.0
      %338 = vmatmul.mubr.f32.gmra.mrb[0].mxu0 %v189
      %v339 = vpop.f32.mrb[0].mxu0
      %v340 = vadd.f32 %v236, %v339
      %v341 = vpop.f32.mrb[0].mxu0
      %342 = vdwg.mxu0
      %v343 = vmax.f32 %v305, 0.0
      %v344 = vmax.f32 %v310, 0.0
      %v345 = vmax.f32 %v315, 0.0
      %v346 = vmax.f32 %v320, 0.0
      %v347 = vmax.f32 %v325, 0.0
      %v348 = vmax.f32 %v330, 0.0
      %v349 = vmax.f32 %v335, 0.0
      %v350 = vmax.f32 %v340, 0.0
      %v351 = vsub.f32 %v343, 1.0
      %v352 = vsub.f32 %v344, 1.0
      %v353 = vsub.f32 %v345, 1.0
      %v354 = vsub.f32 %v346, 1.0
      %v355 = vsub.f32 %v347, 1.0
      %v356 = vsub.f32 %v348, 1.0
      %v357 = vsub.f32 %v349, 1.0
      %v358 = vsub.f32 %v350, 1.0
      %vm359 = vcmask 236544
      %360 = vst.msk [vmem:[%s152] sm:$0xff] %vm359, %v351
      %361 = vst.msk [vmem:[%s152 + $0x8] sm:$0xff] %vm359, %v352
      %362 = vst.msk [vmem:[%s152 + $0x10] sm:$0xff] %vm359, %v353
      %363 = vst.msk [vmem:[%s152 + $0x18] sm:$0xff] %vm359, %v354
      %364 = vst.msk [vmem:[%s152 + $0x20] sm:$0xff] %vm359, %v355
      %365 = vst.msk [vmem:[%s152 + $0x28] sm:$0xff] %vm359, %v356
      %366 = vst.msk [vmem:[%s152 + $0x30] sm:$0xff] %vm359, %v357
      %367 = vst.msk [vmem:[%s152 + $0x38] sm:$0xff] %vm359, %v358
      %v368 = vld [vmem:[%s163] sm:$0xff]
      %v369 = vld [vmem:[%s163 + $0x8] sm:$0xff]
      %v370 = vld [vmem:[%s163 + $0x10] sm:$0xff]
      %v371 = vld [vmem:[%s163 + $0x18] sm:$0xff]
      %v372 = vld [vmem:[%s170] sm:$0xff]
      %v373 = vld [vmem:[%s170 + $0x8] sm:$0xff]
      %v374 = vld [vmem:[%s170 + $0x10] sm:$0xff]
      %v375 = vld [vmem:[%s170 + $0x18] sm:$0xff]
      %v376 = vld [vmem:[%s177] sm:$0xff]
      %v377 = vld [vmem:[%s177 + $0x8] sm:$0xff]
      %v378 = vld [vmem:[%s177 + $0x10] sm:$0xff]
      %v379 = vld [vmem:[%s177 + $0x18] sm:$0xff]
      %s380 = sadd.s32 %s154, 4
      %s381 = smul.u32 %s380, 32
      %s382 = scalar_lea.vmem %s0, %s381
      %v383 = vld [vmem:[%s382] sm:$0xff]
      %v384 = vld [vmem:[%s382 + $0x8] sm:$0xff]
      %v385 = vld [vmem:[%s382 + $0x10] sm:$0xff]
      %v386 = vld [vmem:[%s382 + $0x18] sm:$0xff]
      %v387 = vld [vmem:[%s1] sm:$0xff]
      %v388 = vld [vmem:[%s1 + $0x8] sm:$0xff]
      %v389 = vld [vmem:[%s1 + $0x10] sm:$0xff]
      %v390 = vld [vmem:[%s1 + $0x18] sm:$0xff]
      %v391 = vld [vmem:[%s1 + $0x20] sm:$0xff]
      %v392 = vld [vmem:[%s1 + $0x28] sm:$0xff]
      %v393 = vld [vmem:[%s1 + $0x30] sm:$0xff]
      %v394 = vld [vmem:[%s1 + $0x38] sm:$0xff]
      %v395 = vld [vmem:[%s2] sm:$0xff]
      %v396 = vld [vmem:[%s2 + $0x8] sm:$0xff]
      %v397 = vld [vmem:[%s2 + $0x10] sm:$0xff]
      %v398 = vld [vmem:[%s2 + $0x18] sm:$0xff]
      %v399 = vld [vmem:[%s2 + $0x20] sm:$0xff]
      %v400 = vld [vmem:[%s2 + $0x28] sm:$0xff]
      %v401 = vld [vmem:[%s2 + $0x30] sm:$0xff]
      %v402 = vld [vmem:[%s2 + $0x38] sm:$0xff]
      %404 = vset.pattern.permute.xlu0 0
      %405 = vperm.xlu0 %404, %v395
      %v406 = vpop.permute.xlu0 %405
      %409 = vset.pattern.permute.xlu0 0
      %410 = vperm.xlu0 %409, %v396
      %v411 = vpop.permute.xlu0 %410
      %414 = vset.pattern.permute.xlu0 0
      %415 = vperm.xlu0 %414, %v397
      %v416 = vpop.permute.xlu0 %415
      %419 = vset.pattern.permute.xlu0 0
      %420 = vperm.xlu0 %419, %v398
      %v421 = vpop.permute.xlu0 %420
      %424 = vset.pattern.permute.xlu0 0
      %425 = vperm.xlu0 %424, %v399
      %v426 = vpop.permute.xlu0 %425
      %429 = vset.pattern.permute.xlu0 0
      %430 = vperm.xlu0 %429, %v400
      %v431 = vpop.permute.xlu0 %430
      %434 = vset.pattern.permute.xlu0 0
      %435 = vperm.xlu0 %434, %v401
      %v436 = vpop.permute.xlu0 %435
      %439 = vset.pattern.permute.xlu0 0
      %440 = vperm.xlu0 %439, %v402
      %v441 = vpop.permute.xlu0 %440
      %443 = vmatprep.subr.mxu0 0.0
      %444 = vmatpush1.msra.mxu0 %v368
      %445 = vmatprep.subr.mxu0 0.0
      %446 = vmatpush1.msra.mxu0 %v369
      %447 = vmatprep.subr.mxu0 0.0
      %448 = vmatpush1.msra.mxu0 %v370
      %449 = vmatprep.subr.mxu0 0.0
      %450 = vmatpush1.msra.mxu0 %v371
      %451 = vmatprep.subr.mxu0 0.0
      %452 = vmatpush1.msra.mxu0 %v372
      %453 = vmatprep.subr.mxu0 0.0
      %454 = vmatpush1.msra.mxu0 %v373
      %455 = vmatprep.subr.mxu0 0.0
      %456 = vmatpush1.msra.mxu0 %v374
      %457 = vmatprep.subr.mxu0 0.0
      %458 = vmatpush1.msra.mxu0 %v375
      %459 = vmatprep.subr.mxu0 0.0
      %460 = vmatpush1.msra.mxu0 %v376
      %461 = vmatprep.subr.mxu0 0.0
      %462 = vmatpush1.msra.mxu0 %v377
      %463 = vmatprep.subr.mxu0 0.0
      %464 = vmatpush1.msra.mxu0 %v378
      %465 = vmatprep.subr.mxu0 0.0
      %466 = vmatpush1.msra.mxu0 %v379
      %467 = vmatprep.subr.mxu0 0.0
      %468 = vmatpush1.msra.mxu0 %v383
      %469 = vmatprep.subr.mxu0 0.0
      %470 = vmatpush1.msra.mxu0 %v384
      %471 = vmatprep.subr.mxu0 0.0
      %472 = vmatpush1.msra.mxu0 %v385
      %473 = vmatprep.subr.mxu0 0.0
      %474 = vmatpush1.msra.mxu0 %v386
      %475 = vmatprep.subr.mxu0 0.0
      %476 = vmatpush1.msra.mxu0 0.0
      %477 = vmatprep.subr.mxu0 0.0
      %478 = vmatpush1.msra.mxu0 0.0
      %479 = vmatprep.subr.mxu0 0.0
      %480 = vmatpush1.msra.mxu0 0.0
      %481 = vmatprep.subr.mxu0 0.0
      %482 = vmatpush1.msra.mxu0 0.0
      %483 = vmatprep.subr.mxu0 0.0
      %484 = vmatpush1.msra.mxu0 0.0
      %485 = vmatprep.subr.mxu0 0.0
      %486 = vmatpush1.msra.mxu0 0.0
      %487 = vmatprep.subr.mxu0 0.0
      %488 = vmatpush1.msra.mxu0 0.0
      %489 = vmatprep.subr.mxu0 0.0
      %490 = vmatpush1.msra.mxu0 0.0
      %491 = vmatprep.subr.mxu0 0.0
      %492 = vmatpush1.msra.mxu0 0.0
      %493 = vmatprep.subr.mxu0 0.0
      %494 = vmatpush1.msra.mxu0 0.0
      %495 = vmatprep.subr.mxu0 0.0
      %496 = vmatpush1.msra.mxu0 0.0
      %497 = vmatprep.subr.mxu0 0.0
      %498 = vmatpush1.msra.mxu0 0.0
      %499 = vmatprep.subr.mxu0 0.0
      %500 = vmatpush1.msra.mxu0 0.0
      %501 = vmatprep.subr.mxu0 0.0
      %502 = vmatpush1.msra.mxu0 0.0
      %503 = vmatprep.subr.mxu0 0.0
      %504 = vmatpush1.msra.mxu0 0.0
      %505 = vmatprep.subr.mxu0 0.0
      %506 = vmatpush1.msra.mxu0 0.0
      %507 = vmatprep.mubr.f32.mxu0 0.0
      %508 = vmatmul.mubr.f32.gmra.mrb[0].mxu0 %v387
      %v509 = vpop.f32.mrb[0].mxu0
      %v510 = vadd.f32 %v406, %v509
      %v511 = vpop.f32.mrb[0].mxu0
      %512 = vmatprep.mubr.f32.mxu0 0.0
      %513 = vmatmul.mubr.f32.gmra.mrb[0].mxu0 %v388
      %v514 = vpop.f32.mrb[0].mxu0
      %v515 = vadd.f32 %v411, %v514
      %v516 = vpop.f32.mrb[0].mxu0
      %517 = vmatprep.mubr.f32.mxu0 0.0
      %518 = vmatmul.mubr.f32.gmra.mrb[0].mxu0 %v389
      %v519 = vpop.f32.mrb[0].mxu0
      %v520 = vadd.f32 %v416, %v519
      %v521 = vpop.f32.mrb[0].mxu0
      %522 = vmatprep.mubr.f32.mxu0 0.0
      %523 = vmatmul.mubr.f32.gmra.mrb[0].mxu0 %v390
      %v524 = vpop.f32.mrb[0].mxu0
      %v525 = vadd.f32 %v421, %v524
      %v526 = vpop.f32.mrb[0].mxu0
      %527 = vmatprep.mubr.f32.mxu0 0.0
      %528 = vmatmul.mubr.f32.gmra.mrb[0].mxu0 %v391
      %v529 = vpop.f32.mrb[0].mxu0
      %v530 = vadd.f32 %v426, %v529
      %v531 = vpop.f32.mrb[0].mxu0
      %532 = vmatprep.mubr.f32.mxu0 0.0
      %533 = vmatmul.mubr.f32.gmra.mrb[0].mxu0 %v392
      %v534 = vpop.f32.mrb[0].mxu0
      %v535 = vadd.f32 %v431, %v534
      %v536 = vpop.f32.mrb[0].mxu0
      %537 = vmatprep.mubr.f32.mxu0 0.0
      %538 = vmatmul.mubr.f32.gmra.mrb[0].mxu0 %v393
      %v539 = vpop.f32.mrb[0].mxu0
      %v540 = vadd.f32 %v436, %v539
      %v541 = vpop.f32.mrb[0].mxu0
      %542 = vmatprep.mubr.f32.mxu0 0.0
      %543 = vmatmul.mubr.f32.gmra.mrb[0].mxu0 %v394
      %v544 = vpop.f32.mrb[0].mxu0
      %v545 = vadd.f32 %v441, %v544
      %v546 = vpop.f32.mrb[0].mxu0
      %547 = vdwg.mxu0
      %v548 = vmax.f32 %v510, 0.0
      %v549 = vmax.f32 %v515, 0.0
      %v550 = vmax.f32 %v520, 0.0
      %v551 = vmax.f32 %v525, 0.0
      %v552 = vmax.f32 %v530, 0.0
      %v553 = vmax.f32 %v535, 0.0
      %v554 = vmax.f32 %v540, 0.0
      %v555 = vmax.f32 %v545, 0.0
      %v556 = vsub.f32 %v548, 1.0
      %v557 = vsub.f32 %v549, 1.0
      %v558 = vsub.f32 %v550, 1.0
      %v559 = vsub.f32 %v551, 1.0
      %v560 = vsub.f32 %v552, 1.0
      %v561 = vsub.f32 %v553, 1.0
      %v562 = vsub.f32 %v554, 1.0
      %v563 = vsub.f32 %v555, 1.0
      %s564 = scalar_lea.vmem %s152, 64
      %565 = vst.msk [vmem:[%s564] sm:$0xff] %vm359, %v556
      %566 = vst.msk [vmem:[%s564 + $0x8] sm:$0xff] %vm359, %v557
      %567 = vst.msk [vmem:[%s564 + $0x10] sm:$0xff] %vm359, %v558
      %568 = vst.msk [vmem:[%s564 + $0x18] sm:$0xff] %vm359, %v559
      %569 = vst.msk [vmem:[%s564 + $0x20] sm:$0xff] %vm359, %v560
      %570 = vst.msk [vmem:[%s564 + $0x28] sm:$0xff] %vm359, %v561
      %571 = vst.msk [vmem:[%s564 + $0x30] sm:$0xff] %vm359, %v562
      %572 = vst.msk [vmem:[%s564 + $0x38] sm:$0xff] %vm359, %v563
      %v573 = vld [vmem:[%s170] sm:$0xff]
      %v574 = vld [vmem:[%s170 + $0x8] sm:$0xff]
      %v575 = vld [vmem:[%s170 + $0x10] sm:$0xff]
      %v576 = vld [vmem:[%s170 + $0x18] sm:$0xff]
      %v577 = vld [vmem:[%s177] sm:$0xff]
      %v578 = vld [vmem:[%s177 + $0x8] sm:$0xff]
      %v579 = vld [vmem:[%s177 + $0x10] sm:$0xff]
      %v580 = vld [vmem:[%s177 + $0x18] sm:$0xff]
      %v581 = vld [vmem:[%s382] sm:$0xff]
      %v582 = vld [vmem:[%s382 + $0x8] sm:$0xff]
      %v583 = vld [vmem:[%s382 + $0x10] sm:$0xff]
      %v584 = vld [vmem:[%s382 + $0x18] sm:$0xff]
      %s585 = sadd.s32 %s154, 5
      %s586 = smul.u32 %s585, 32
      %s587 = scalar_lea.vmem %s0, %s586
      %v588 = vld [vmem:[%s587] sm:$0xff]
      %v589 = vld [vmem:[%s587 + $0x8] sm:$0xff]
      %v590 = vld [vmem:[%s587 + $0x10] sm:$0xff]
      %v591 = vld [vmem:[%s587 + $0x18] sm:$0xff]
      %v592 = vld [vmem:[%s1] sm:$0xff]
      %v593 = vld [vmem:[%s1 + $0x8] sm:$0xff]
      %v594 = vld [vmem:[%s1 + $0x10] sm:$0xff]
      %v595 = vld [vmem:[%s1 + $0x18] sm:$0xff]
      %v596 = vld [vmem:[%s1 + $0x20] sm:$0xff]
      %v597 = vld [vmem:[%s1 + $0x28] sm:$0xff]
      %v598 = vld [vmem:[%s1 + $0x30] sm:$0xff]
      %v599 = vld [vmem:[%s1 + $0x38] sm:$0xff]
      %v600 = vld [vmem:[%s2] sm:$0xff]
      %v601 = vld [vmem:[%s2 + $0x8] sm:$0xff]
      %v602 = vld [vmem:[%s2 + $0x10] sm:$0xff]
      %v603 = vld [vmem:[%s2 + $0x18] sm:$0xff]
      %v604 = vld [vmem:[%s2 + $0x20] sm:$0xff]
      %v605 = vld [vmem:[%s2 + $0x28] sm:$0xff]
      %v606 = vld [vmem:[%s2 + $0x30] sm:$0xff]
      %v607 = vld [vmem:[%s2 + $0x38] sm:$0xff]
      %609 = vset.pattern.permute.xlu0 0
      %610 = vperm.xlu0 %609, %v600
      %v611 = vpop.permute.xlu0 %610
      %614 = vset.pattern.permute.xlu0 0
      %615 = vperm.xlu0 %614, %v601
      %v616 = vpop.permute.xlu0 %615
      %619 = vset.pattern.permute.xlu0 0
      %620 = vperm.xlu0 %619, %v602
      %v621 = vpop.permute.xlu0 %620
      %624 = vset.pattern.permute.xlu0 0
      %625 = vperm.xlu0 %624, %v603
      %v626 = vpop.permute.xlu0 %625
      %629 = vset.pattern.permute.xlu0 0
      %630 = vperm.xlu0 %629, %v604
      %v631 = vpop.permute.xlu0 %630
      %634 = vset.pattern.permute.xlu0 0
      %635 = vperm.xlu0 %634, %v605
      %v636 = vpop.permute.xlu0 %635
      %639 = vset.pattern.permute.xlu0 0
      %640 = vperm.xlu0 %639, %v606
      %v641 = vpop.permute.xlu0 %640
      %644 = vset.pattern.permute.xlu0 0
      %645 = vperm.xlu0 %644, %v607
      %v646 = vpop.permute.xlu0 %645
      %648 = vmatprep.subr.mxu0 0.0
      %649 = vmatpush1.msra.mxu0 %v573
      %650 = vmatprep.subr.mxu0 0.0
      %651 = vmatpush1.msra.mxu0 %v574
      %652 = vmatprep.subr.mxu0 0.0
      %653 = vmatpush1.msra.mxu0 %v575
      %654 = vmatprep.subr.mxu0 0.0
      %655 = vmatpush1.msra.mxu0 %v576
      %656 = vmatprep.subr.mxu0 0.0
      %657 = vmatpush1.msra.mxu0 %v577
      %658 = vmatprep.subr.mxu0 0.0
      %659 = vmatpush1.msra.mxu0 %v578
      %660 = vmatprep.subr.mxu0 0.0
      %661 = vmatpush1.msra.mxu0 %v579
      %662 = vmatprep.subr.mxu0 0.0
      %663 = vmatpush1.msra.mxu0 %v580
      %664 = vmatprep.subr.mxu0 0.0
      %665 = vmatpush1.msra.mxu0 %v581
      %666 = vmatprep.subr.mxu0 0.0
      %667 = vmatpush1.msra.mxu0 %v582
      %668 = vmatprep.subr.mxu0 0.0
      %669 = vmatpush1.msra.mxu0 %v583
      %670 = vmatprep.subr.mxu0 0.0
      %671 = vmatpush1.msra.mxu0 %v584
      %672 = vmatprep.subr.mxu0 0.0
      %673 = vmatpush1.msra.mxu0 %v588
      %674 = vmatprep.subr.mxu0 0.0
      %675 = vmatpush1.msra.mxu0 %v589
      %676 = vmatprep.subr.mxu0 0.0
      %677 = vmatpush1.msra.mxu0 %v590
      %678 = vmatprep.subr.mxu0 0.0
      %679 = vmatpush1.msra.mxu0 %v591
      %680 = vmatprep.subr.mxu0 0.0
      %681 = vmatpush1.msra.mxu0 0.0
      %682 = vmatprep.subr.mxu0 0.0
      %683 = vmatpush1.msra.mxu0 0.0
      %684 = vmatprep.subr.mxu0 0.0
      %685 = vmatpush1.msra.mxu0 0.0
      %686 = vmatprep.subr.mxu0 0.0
      %687 = vmatpush1.msra.mxu0 0.0
      %688 = vmatprep.subr.mxu0 0.0
      %689 = vmatpush1.msra.mxu0 0.0
      %690 = vmatprep.subr.mxu0 0.0
      %691 = vmatpush1.msra.mxu0 0.0
      %692 = vmatprep.subr.mxu0 0.0
      %693 = vmatpush1.msra.mxu0 0.0
      %694 = vmatprep.subr.mxu0 0.0
      %695 = vmatpush1.msra.mxu0 0.0
      %696 = vmatprep.subr.mxu0 0.0
      %697 = vmatpush1.msra.mxu0 0.0
      %698 = vmatprep.subr.mxu0 0.0
      %699 = vmatpush1.msra.mxu0 0.0
      %700 = vmatprep.subr.mxu0 0.0
      %701 = vmatpush1.msra.mxu0 0.0
      %702 = vmatprep.subr.mxu0 0.0
      %703 = vmatpush1.msra.mxu0 0.0
      %704 = vmatprep.subr.mxu0 0.0
      %705 = vmatpush1.msra.mxu0 0.0
      %706 = vmatprep.subr.mxu0 0.0
      %707 = vmatpush1.msra.mxu0 0.0
      %708 = vmatprep.subr.mxu0 0.0
      %709 = vmatpush1.msra.mxu0 0.0
      %710 = vmatprep.subr.mxu0 0.0
      %711 = vmatpush1.msra.mxu0 0.0
      %712 = vmatprep.mubr.f32.mxu0 0.0
      %713 = vmatmul.mubr.f32.gmra.mrb[0].mxu0 %v592
      %v714 = vpop.f32.mrb[0].mxu0
      %v715 = vadd.f32 %v611, %v714
      %v716 = vpop.f32.mrb[0].mxu0
      %717 = vmatprep.mubr.f32.mxu0 0.0
      %718 = vmatmul.mubr.f32.gmra.mrb[0].mxu0 %v593
      %v719 = vpop.f32.mrb[0].mxu0
      %v720 = vadd.f32 %v616, %v719
      %v721 = vpop.f32.mrb[0].mxu0
      %722 = vmatprep.mubr.f32.mxu0 0.0
      %723 = vmatmul.mubr.f32.gmra.mrb[0].mxu0 %v594
      %v724 = vpop.f32.mrb[0].mxu0
      %v725 = vadd.f32 %v621, %v724
      %v726 = vpop.f32.mrb[0].mxu0
      %727 = vmatprep.mubr.f32.mxu0 0.0
      %728 = vmatmul.mubr.f32.gmra.mrb[0].mxu0 %v595
      %v729 = vpop.f32.mrb[0].mxu0
      %v730 = vadd.f32 %v626, %v729
      %v731 = vpop.f32.mrb[0].mxu0
      %732 = vmatprep.mubr.f32.mxu0 0.0
      %733 = vmatmul.mubr.f32.gmra.mrb[0].mxu0 %v596
      %v734 = vpop.f32.mrb[0].mxu0
      %v735 = vadd.f32 %v631, %v734
      %v736 = vpop.f32.mrb[0].mxu0
      %737 = vmatprep.mubr.f32.mxu0 0.0
      %738 = vmatmul.mubr.f32.gmra.mrb[0].mxu0 %v597
      %v739 = vpop.f32.mrb[0].mxu0
      %v740 = vadd.f32 %v636, %v739
      %v741 = vpop.f32.mrb[0].mxu0
      %742 = vmatprep.mubr.f32.mxu0 0.0
      %743 = vmatmul.mubr.f32.gmra.mrb[0].mxu0 %v598
      %v744 = vpop.f32.mrb[0].mxu0
      %v745 = vadd.f32 %v641, %v744
      %v746 = vpop.f32.mrb[0].mxu0
      %747 = vmatprep.mubr.f32.mxu0 0.0
      %748 = vmatmul.mubr.f32.gmra.mrb[0].mxu0 %v599
      %v749 = vpop.f32.mrb[0].mxu0
      %v750 = vadd.f32 %v646, %v749
      %v751 = vpop.f32.mrb[0].mxu0
      %752 = vdwg.mxu0
      %v753 = vmax.f32 %v715, 0.0
      %v754 = vmax.f32 %v720, 0.0
      %v755 = vmax.f32 %v725, 0.0
      %v756 = vmax.f32 %v730, 0.0
      %v757 = vmax.f32 %v735, 0.0
      %v758 = vmax.f32 %v740, 0.0
      %v759 = vmax.f32 %v745, 0.0
      %v760 = vmax.f32 %v750, 0.0
      %v761 = vsub.f32 %v753, 1.0
      %v762 = vsub.f32 %v754, 1.0
      %v763 = vsub.f32 %v755, 1.0
      %v764 = vsub.f32 %v756, 1.0
      %v765 = vsub.f32 %v757, 1.0
      %v766 = vsub.f32 %v758, 1.0
      %v767 = vsub.f32 %v759, 1.0
      %v768 = vsub.f32 %v760, 1.0
      %s769 = scalar_lea.vmem %s152, 128
      %770 = vst.msk [vmem:[%s769] sm:$0xff] %vm359, %v761
      %771 = vst.msk [vmem:[%s769 + $0x8] sm:$0xff] %vm359, %v762
      %772 = vst.msk [vmem:[%s769 + $0x10] sm:$0xff] %vm359, %v763
      %773 = vst.msk [vmem:[%s769 + $0x18] sm:$0xff] %vm359, %v764
      %774 = vst.msk [vmem:[%s769 + $0x20] sm:$0xff] %vm359, %v765
      %775 = vst.msk [vmem:[%s769 + $0x28] sm:$0xff] %vm359, %v766
      %776 = vst.msk [vmem:[%s769 + $0x30] sm:$0xff] %vm359, %v767
      %777 = vst.msk [vmem:[%s769 + $0x38] sm:$0xff] %vm359, %v768
      %v778 = vld [vmem:[%s177] sm:$0xff]
      %v779 = vld [vmem:[%s177 + $0x8] sm:$0xff]
      %v780 = vld [vmem:[%s177 + $0x10] sm:$0xff]
      %v781 = vld [vmem:[%s177 + $0x18] sm:$0xff]
      %v782 = vld [vmem:[%s382] sm:$0xff]
      %v783 = vld [vmem:[%s382 + $0x8] sm:$0xff]
      %v784 = vld [vmem:[%s382 + $0x10] sm:$0xff]
      %v785 = vld [vmem:[%s382 + $0x18] sm:$0xff]
      %v786 = vld [vmem:[%s587] sm:$0xff]
      %v787 = vld [vmem:[%s587 + $0x8] sm:$0xff]
      %v788 = vld [vmem:[%s587 + $0x10] sm:$0xff]
      %v789 = vld [vmem:[%s587 + $0x18] sm:$0xff]
      %s790 = sadd.s32 %s154, 6
      %s791 = smul.u32 %s790, 32
      %s792 = scalar_lea.vmem %s0, %s791
      %v793 = vld [vmem:[%s792] sm:$0xff]
      %v794 = vld [vmem:[%s792 + $0x8] sm:$0xff]
      %v795 = vld [vmem:[%s792 + $0x10] sm:$0xff]
      %v796 = vld [vmem:[%s792 + $0x18] sm:$0xff]
      %v797 = vld [vmem:[%s1] sm:$0xff]
      %v798 = vld [vmem:[%s1 + $0x8] sm:$0xff]
      %v799 = vld [vmem:[%s1 + $0x10] sm:$0xff]
      %v800 = vld [vmem:[%s1 + $0x18] sm:$0xff]
      %v801 = vld [vmem:[%s1 + $0x20] sm:$0xff]
      %v802 = vld [vmem:[%s1 + $0x28] sm:$0xff]
      %v803 = vld [vmem:[%s1 + $0x30] sm:$0xff]
      %v804 = vld [vmem:[%s1 + $0x38] sm:$0xff]
      %v805 = vld [vmem:[%s2] sm:$0xff]
      %v806 = vld [vmem:[%s2 + $0x8] sm:$0xff]
      %v807 = vld [vmem:[%s2 + $0x10] sm:$0xff]
      %v808 = vld [vmem:[%s2 + $0x18] sm:$0xff]
      %v809 = vld [vmem:[%s2 + $0x20] sm:$0xff]
      %v810 = vld [vmem:[%s2 + $0x28] sm:$0xff]
      %v811 = vld [vmem:[%s2 + $0x30] sm:$0xff]
      %v812 = vld [vmem:[%s2 + $0x38] sm:$0xff]
      %814 = vset.pattern.permute.xlu0 0
      %815 = vperm.xlu0 %814, %v805
      %v816 = vpop.permute.xlu0 %815
      %819 = vset.pattern.permute.xlu0 0
      %820 = vperm.xlu0 %819, %v806
      %v821 = vpop.permute.xlu0 %820
      %824 = vset.pattern.permute.xlu0 0
      %825 = vperm.xlu0 %824, %v807
      %v826 = vpop.permute.xlu0 %825
      %829 = vset.pattern.permute.xlu0 0
      %830 = vperm.xlu0 %829, %v808
      %v831 = vpop.permute.xlu0 %830
      %834 = vset.pattern.permute.xlu0 0
      %835 = vperm.xlu0 %834, %v809
      %v836 = vpop.permute.xlu0 %835
      %839 = vset.pattern.permute.xlu0 0
      %840 = vperm.xlu0 %839, %v810
      %v841 = vpop.permute.xlu0 %840
      %844 = vset.pattern.permute.xlu0 0
      %845 = vperm.xlu0 %844, %v811
      %v846 = vpop.permute.xlu0 %845
      %849 = vset.pattern.permute.xlu0 0
      %850 = vperm.xlu0 %849, %v812
      %v851 = vpop.permute.xlu0 %850
      %853 = vmatprep.subr.mxu0 0.0
      %854 = vmatpush1.msra.mxu0 %v778
      %855 = vmatprep.subr.mxu0 0.0
      %856 = vmatpush1.msra.mxu0 %v779
      %857 = vmatprep.subr.mxu0 0.0
      %858 = vmatpush1.msra.mxu0 %v780
      %859 = vmatprep.subr.mxu0 0.0
      %860 = vmatpush1.msra.mxu0 %v781
      %861 = vmatprep.subr.mxu0 0.0
      %862 = vmatpush1.msra.mxu0 %v782
      %863 = vmatprep.subr.mxu0 0.0
      %864 = vmatpush1.msra.mxu0 %v783
      %865 = vmatprep.subr.mxu0 0.0
      %866 = vmatpush1.msra.mxu0 %v784
      %867 = vmatprep.subr.mxu0 0.0
      %868 = vmatpush1.msra.mxu0 %v785
      %869 = vmatprep.subr.mxu0 0.0
      %870 = vmatpush1.msra.mxu0 %v786
      %871 = vmatprep.subr.mxu0 0.0
      %872 = vmatpush1.msra.mxu0 %v787
      %873 = vmatprep.subr.mxu0 0.0
      %874 = vmatpush1.msra.mxu0 %v788
      %875 = vmatprep.subr.mxu0 0.0
      %876 = vmatpush1.msra.mxu0 %v789
      %877 = vmatprep.subr.mxu0 0.0
      %878 = vmatpush1.msra.mxu0 %v793
      %879 = vmatprep.subr.mxu0 0.0
      %880 = vmatpush1.msra.mxu0 %v794
      %881 = vmatprep.subr.mxu0 0.0
      %882 = vmatpush1.msra.mxu0 %v795
      %883 = vmatprep.subr.mxu0 0.0
      %884 = vmatpush1.msra.mxu0 %v796
      %885 = vmatprep.subr.mxu0 0.0
      %886 = vmatpush1.msra.mxu0 0.0
      %887 = vmatprep.subr.mxu0 0.0
      %888 = vmatpush1.msra.mxu0 0.0
      %889 = vmatprep.subr.mxu0 0.0
      %890 = vmatpush1.msra.mxu0 0.0
      %891 = vmatprep.subr.mxu0 0.0
      %892 = vmatpush1.msra.mxu0 0.0
      %893 = vmatprep.subr.mxu0 0.0
      %894 = vmatpush1.msra.mxu0 0.0
      %895 = vmatprep.subr.mxu0 0.0
      %896 = vmatpush1.msra.mxu0 0.0
      %897 = vmatprep.subr.mxu0 0.0
      %898 = vmatpush1.msra.mxu0 0.0
      %899 = vmatprep.subr.mxu0 0.0
      %900 = vmatpush1.msra.mxu0 0.0
      %901 = vmatprep.subr.mxu0 0.0
      %902 = vmatpush1.msra.mxu0 0.0
      %903 = vmatprep.subr.mxu0 0.0
      %904 = vmatpush1.msra.mxu0 0.0
      %905 = vmatprep.subr.mxu0 0.0
      %906 = vmatpush1.msra.mxu0 0.0
      %907 = vmatprep.subr.mxu0 0.0
      %908 = vmatpush1.msra.mxu0 0.0
      %909 = vmatprep.subr.mxu0 0.0
      %910 = vmatpush1.msra.mxu0 0.0
      %911 = vmatprep.subr.mxu0 0.0
      %912 = vmatpush1.msra.mxu0 0.0
      %913 = vmatprep.subr.mxu0 0.0
      %914 = vmatpush1.msra.mxu0 0.0
      %915 = vmatprep.subr.mxu0 0.0
      %916 = vmatpush1.msra.mxu0 0.0
      %917 = vmatprep.mubr.f32.mxu0 0.0
      %918 = vmatmul.mubr.f32.gmra.mrb[0].mxu0 %v797
      %v919 = vpop.f32.mrb[0].mxu0
      %v920 = vadd.f32 %v816, %v919
      %v921 = vpop.f32.mrb[0].mxu0
      %922 = vmatprep.mubr.f32.mxu0 0.0
      %923 = vmatmul.mubr.f32.gmra.mrb[0].mxu0 %v798
      %v924 = vpop.f32.mrb[0].mxu0
      %v925 = vadd.f32 %v821, %v924
      %v926 = vpop.f32.mrb[0].mxu0
      %927 = vmatprep.mubr.f32.mxu0 0.0
      %928 = vmatmul.mubr.f32.gmra.mrb[0].mxu0 %v799
      %v929 = vpop.f32.mrb[0].mxu0
      %v930 = vadd.f32 %v826, %v929
      %v931 = vpop.f32.mrb[0].mxu0
      %932 = vmatprep.mubr.f32.mxu0 0.0
      %933 = vmatmul.mubr.f32.gmra.mrb[0].mxu0 %v800
      %v934 = vpop.f32.mrb[0].mxu0
      %v935 = vadd.f32 %v831, %v934
      %v936 = vpop.f32.mrb[0].mxu0
      %937 = vmatprep.mubr.f32.mxu0 0.0
      %938 = vmatmul.mubr.f32.gmra.mrb[0].mxu0 %v801
      %v939 = vpop.f32.mrb[0].mxu0
      %v940 = vadd.f32 %v836, %v939
      %v941 = vpop.f32.mrb[0].mxu0
      %942 = vmatprep.mubr.f32.mxu0 0.0
      %943 = vmatmul.mubr.f32.gmra.mrb[0].mxu0 %v802
      %v944 = vpop.f32.mrb[0].mxu0
      %v945 = vadd.f32 %v841, %v944
      %v946 = vpop.f32.mrb[0].mxu0
      %947 = vmatprep.mubr.f32.mxu0 0.0
      %948 = vmatmul.mubr.f32.gmra.mrb[0].mxu0 %v803
      %v949 = vpop.f32.mrb[0].mxu0
      %v950 = vadd.f32 %v846, %v949
      %v951 = vpop.f32.mrb[0].mxu0
      %952 = vmatprep.mubr.f32.mxu0 0.0
      %953 = vmatmul.mubr.f32.gmra.mrb[0].mxu0 %v804
      %v954 = vpop.f32.mrb[0].mxu0
      %v955 = vadd.f32 %v851, %v954
      %v956 = vpop.f32.mrb[0].mxu0
      %957 = vdwg.mxu0
      %v958 = vmax.f32 %v920, 0.0
      %v959 = vmax.f32 %v925, 0.0
      %v960 = vmax.f32 %v930, 0.0
      %v961 = vmax.f32 %v935, 0.0
      %v962 = vmax.f32 %v940, 0.0
      %v963 = vmax.f32 %v945, 0.0
      %v964 = vmax.f32 %v950, 0.0
      %v965 = vmax.f32 %v955, 0.0
      %v966 = vsub.f32 %v958, 1.0
      %v967 = vsub.f32 %v959, 1.0
      %v968 = vsub.f32 %v960, 1.0
      %v969 = vsub.f32 %v961, 1.0
      %v970 = vsub.f32 %v962, 1.0
      %v971 = vsub.f32 %v963, 1.0
      %v972 = vsub.f32 %v964, 1.0
      %v973 = vsub.f32 %v965, 1.0
      %s974 = scalar_lea.vmem %s152, 192
      %975 = vst.msk [vmem:[%s974] sm:$0xff] %vm359, %v966
      %976 = vst.msk [vmem:[%s974 + $0x8] sm:$0xff] %vm359, %v967
      %977 = vst.msk [vmem:[%s974 + $0x10] sm:$0xff] %vm359, %v968
      %978 = vst.msk [vmem:[%s974 + $0x18] sm:$0xff] %vm359, %v969
      %979 = vst.msk [vmem:[%s974 + $0x20] sm:$0xff] %vm359, %v970
      %980 = vst.msk [vmem:[%s974 + $0x28] sm:$0xff] %vm359, %v971
      %981 = vst.msk [vmem:[%s974 + $0x30] sm:$0xff] %vm359, %v972
      %982 = vst.msk [vmem:[%s974 + $0x38] sm:$0xff] %vm359, %v973
      %v983 = vld [vmem:[%s382] sm:$0xff]
      %v984 = vld [vmem:[%s382 + $0x8] sm:$0xff]
      %v985 = vld [vmem:[%s382 + $0x10] sm:$0xff]
      %v986 = vld [vmem:[%s382 + $0x18] sm:$0xff]
      %v987 = vld [vmem:[%s587] sm:$0xff]
      %v988 = vld [vmem:[%s587 + $0x8] sm:$0xff]
      %v989 = vld [vmem:[%s587 + $0x10] sm:$0xff]
      %v990 = vld [vmem:[%s587 + $0x18] sm:$0xff]
      %v991 = vld [vmem:[%s792] sm:$0xff]
      %v992 = vld [vmem:[%s792 + $0x8] sm:$0xff]
      %v993 = vld [vmem:[%s792 + $0x10] sm:$0xff]
      %v994 = vld [vmem:[%s792 + $0x18] sm:$0xff]
      %s995 = sadd.s32 %s154, 7
      %s996 = smul.u32 %s995, 32
      %s997 = scalar_lea.vmem %s0, %s996
      %v998 = vld [vmem:[%s997] sm:$0xff]
      %v999 = vld [vmem:[%s997 + $0x8] sm:$0xff]
      %v1000 = vld [vmem:[%s997 + $0x10] sm:$0xff]
      %v1001 = vld [vmem:[%s997 + $0x18] sm:$0xff]
      %v1002 = vld [vmem:[%s1] sm:$0xff]
      %v1003 = vld [vmem:[%s1 + $0x8] sm:$0xff]
      %v1004 = vld [vmem:[%s1 + $0x10] sm:$0xff]
      %v1005 = vld [vmem:[%s1 + $0x18] sm:$0xff]
      %v1006 = vld [vmem:[%s1 + $0x20] sm:$0xff]
      %v1007 = vld [vmem:[%s1 + $0x28] sm:$0xff]
      %v1008 = vld [vmem:[%s1 + $0x30] sm:$0xff]
      %v1009 = vld [vmem:[%s1 + $0x38] sm:$0xff]
      %v1010 = vld [vmem:[%s2] sm:$0xff]
      %v1011 = vld [vmem:[%s2 + $0x8] sm:$0xff]
      %v1012 = vld [vmem:[%s2 + $0x10] sm:$0xff]
      %v1013 = vld [vmem:[%s2 + $0x18] sm:$0xff]
      %v1014 = vld [vmem:[%s2 + $0x20] sm:$0xff]
      %v1015 = vld [vmem:[%s2 + $0x28] sm:$0xff]
      %v1016 = vld [vmem:[%s2 + $0x30] sm:$0xff]
      %v1017 = vld [vmem:[%s2 + $0x38] sm:$0xff]
      %1019 = vset.pattern.permute.xlu0 0
      %1020 = vperm.xlu0 %1019, %v1010
      %v1021 = vpop.permute.xlu0 %1020
      %1024 = vset.pattern.permute.xlu0 0
      %1025 = vperm.xlu0 %1024, %v1011
      %v1026 = vpop.permute.xlu0 %1025
      %1029 = vset.pattern.permute.xlu0 0
      %1030 = vperm.xlu0 %1029, %v1012
      %v1031 = vpop.permute.xlu0 %1030
      %1034 = vset.pattern.permute.xlu0 0
      %1035 = vperm.xlu0 %1034, %v1013
      %v1036 = vpop.permute.xlu0 %1035
      %1039 = vset.pattern.permute.xlu0 0
      %1040 = vperm.xlu0 %1039, %v1014
      %v1041 = vpop.permute.xlu0 %1040
      %1044 = vset.pattern.permute.xlu0 0
      %1045 = vperm.xlu0 %1044, %v1015
      %v1046 = vpop.permute.xlu0 %1045
      %1049 = vset.pattern.permute.xlu0 0
      %1050 = vperm.xlu0 %1049, %v1016
      %v1051 = vpop.permute.xlu0 %1050
      %1054 = vset.pattern.permute.xlu0 0
      %1055 = vperm.xlu0 %1054, %v1017
      %v1056 = vpop.permute.xlu0 %1055
      %1058 = vmatprep.subr.mxu0 0.0
      %1059 = vmatpush1.msra.mxu0 %v983
      %1060 = vmatprep.subr.mxu0 0.0
      %1061 = vmatpush1.msra.mxu0 %v984
      %1062 = vmatprep.subr.mxu0 0.0
      %1063 = vmatpush1.msra.mxu0 %v985
      %1064 = vmatprep.subr.mxu0 0.0
      %1065 = vmatpush1.msra.mxu0 %v986
      %1066 = vmatprep.subr.mxu0 0.0
      %1067 = vmatpush1.msra.mxu0 %v987
      %1068 = vmatprep.subr.mxu0 0.0
      %1069 = vmatpush1.msra.mxu0 %v988
      %1070 = vmatprep.subr.mxu0 0.0
      %1071 = vmatpush1.msra.mxu0 %v989
      %1072 = vmatprep.subr.mxu0 0.0
      %1073 = vmatpush1.msra.mxu0 %v990
      %1074 = vmatprep.subr.mxu0 0.0
      %1075 = vmatpush1.msra.mxu0 %v991
      %1076 = vmatprep.subr.mxu0 0.0
      %1077 = vmatpush1.msra.mxu0 %v992
      %1078 = vmatprep.subr.mxu0 0.0
      %1079 = vmatpush1.msra.mxu0 %v993
      %1080 = vmatprep.subr.mxu0 0.0
      %1081 = vmatpush1.msra.mxu0 %v994
      %1082 = vmatprep.subr.mxu0 0.0
      %1083 = vmatpush1.msra.mxu0 %v998
      %1084 = vmatprep.subr.mxu0 0.0
      %1085 = vmatpush1.msra.mxu0 %v999
      %1086 = vmatprep.subr.mxu0 0.0
      %1087 = vmatpush1.msra.mxu0 %v1000
      %1088 = vmatprep.subr.mxu0 0.0
      %1089 = vmatpush1.msra.mxu0 %v1001
      %1090 = vmatprep.subr.mxu0 0.0
      %1091 = vmatpush1.msra.mxu0 0.0
      %1092 = vmatprep.subr.mxu0 0.0
      %1093 = vmatpush1.msra.mxu0 0.0
      %1094 = vmatprep.subr.mxu0 0.0
      %1095 = vmatpush1.msra.mxu0 0.0
      %1096 = vmatprep.subr.mxu0 0.0
      %1097 = vmatpush1.msra.mxu0 0.0
      %1098 = vmatprep.subr.mxu0 0.0
      %1099 = vmatpush1.msra.mxu0 0.0
      %1100 = vmatprep.subr.mxu0 0.0
      %1101 = vmatpush1.msra.mxu0 0.0
      %1102 = vmatprep.subr.mxu0 0.0
      %1103 = vmatpush1.msra.mxu0 0.0
      %1104 = vmatprep.subr.mxu0 0.0
      %1105 = vmatpush1.msra.mxu0 0.0
      %1106 = vmatprep.subr.mxu0 0.0
      %1107 = vmatpush1.msra.mxu0 0.0
      %1108 = vmatprep.subr.mxu0 0.0
      %1109 = vmatpush1.msra.mxu0 0.0
      %1110 = vmatprep.subr.mxu0 0.0
      %1111 = vmatpush1.msra.mxu0 0.0
      %1112 = vmatprep.subr.mxu0 0.0
      %1113 = vmatpush1.msra.mxu0 0.0
      %1114 = vmatprep.subr.mxu0 0.0
      %1115 = vmatpush1.msra.mxu0 0.0
      %1116 = vmatprep.subr.mxu0 0.0
      %1117 = vmatpush1.msra.mxu0 0.0
      %1118 = vmatprep.subr.mxu0 0.0
      %1119 = vmatpush1.msra.mxu0 0.0
      %1120 = vmatprep.subr.mxu0 0.0
      %1121 = vmatpush1.msra.mxu0 0.0
      %1122 = vmatprep.mubr.f32.mxu0 0.0
      %1123 = vmatmul.mubr.f32.gmra.mrb[0].mxu0 %v1002
      %v1124 = vpop.f32.mrb[0].mxu0
      %v1125 = vadd.f32 %v1021, %v1124
      %v1126 = vpop.f32.mrb[0].mxu0
      %1127 = vmatprep.mubr.f32.mxu0 0.0
      %1128 = vmatmul.mubr.f32.gmra.mrb[0].mxu0 %v1003
      %v1129 = vpop.f32.mrb[0].mxu0
      %v1130 = vadd.f32 %v1026, %v1129
      %v1131 = vpop.f32.mrb[0].mxu0
      %1132 = vmatprep.mubr.f32.mxu0 0.0
      %1133 = vmatmul.mubr.f32.gmra.mrb[0].mxu0 %v1004
      %v1134 = vpop.f32.mrb[0].mxu0
      %v1135 = vadd.f32 %v1031, %v1134
      %v1136 = vpop.f32.mrb[0].mxu0
      %1137 = vmatprep.mubr.f32.mxu0 0.0
      %1138 = vmatmul.mubr.f32.gmra.mrb[0].mxu0 %v1005
      %v1139 = vpop.f32.mrb[0].mxu0
      %v1140 = vadd.f32 %v1036, %v1139
      %v1141 = vpop.f32.mrb[0].mxu0
      %1142 = vmatprep.mubr.f32.mxu0 0.0
      %1143 = vmatmul.mubr.f32.gmra.mrb[0].mxu0 %v1006
      %v1144 = vpop.f32.mrb[0].mxu0
      %v1145 = vadd.f32 %v1041, %v1144
      %v1146 = vpop.f32.mrb[0].mxu0
      %1147 = vmatprep.mubr.f32.mxu0 0.0
      %1148 = vmatmul.mubr.f32.gmra.mrb[0].mxu0 %v1007
      %v1149 = vpop.f32.mrb[0].mxu0
      %v1150 = vadd.f32 %v1046, %v1149
      %v1151 = vpop.f32.mrb[0].mxu0
      %1152 = vmatprep.mubr.f32.mxu0 0.0
      %1153 = vmatmul.mubr.f32.gmra.mrb[0].mxu0 %v1008
      %v1154 = vpop.f32.mrb[0].mxu0
      %v1155 = vadd.f32 %v1051, %v1154
      %v1156 = vpop.f32.mrb[0].mxu0
      %1157 = vmatprep.mubr.f32.mxu0 0.0
      %1158 = vmatmul.mubr.f32.gmra.mrb[0].mxu0 %v1009
      %v1159 = vpop.f32.mrb[0].mxu0
      %v1160 = vadd.f32 %v1056, %v1159
      %v1161 = vpop.f32.mrb[0].mxu0
      %1162 = vdwg.mxu0
      %v1163 = vmax.f32 %v1125, 0.0
      %v1164 = vmax.f32 %v1130, 0.0
      %v1165 = vmax.f32 %v1135, 0.0
      %v1166 = vmax.f32 %v1140, 0.0
      %v1167 = vmax.f32 %v1145, 0.0
      %v1168 = vmax.f32 %v1150, 0.0
      %v1169 = vmax.f32 %v1155, 0.0
      %v1170 = vmax.f32 %v1160, 0.0
      %v1171 = vsub.f32 %v1163, 1.0
      %v1172 = vsub.f32 %v1164, 1.0
      %v1173 = vsub.f32 %v1165, 1.0
      %v1174 = vsub.f32 %v1166, 1.0
      %v1175 = vsub.f32 %v1167, 1.0
      %v1176 = vsub.f32 %v1168, 1.0
      %v1177 = vsub.f32 %v1169, 1.0
      %v1178 = vsub.f32 %v1170, 1.0
      %s1179 = scalar_lea.vmem %s152, 256
      %1180 = vst.msk [vmem:[%s1179] sm:$0xff] %vm359, %v1171
      %1181 = vst.msk [vmem:[%s1179 + $0x8] sm:$0xff] %vm359, %v1172
      %1182 = vst.msk [vmem:[%s1179 + $0x10] sm:$0xff] %vm359, %v1173
      %1183 = vst.msk [vmem:[%s1179 + $0x18] sm:$0xff] %vm359, %v1174
      %1184 = vst.msk [vmem:[%s1179 + $0x20] sm:$0xff] %vm359, %v1175
      %1185 = vst.msk [vmem:[%s1179 + $0x28] sm:$0xff] %vm359, %v1176
      %1186 = vst.msk [vmem:[%s1179 + $0x30] sm:$0xff] %vm359, %v1177
      %1187 = vst.msk [vmem:[%s1179 + $0x38] sm:$0xff] %vm359, %v1178
      %v1188 = vld [vmem:[%s587] sm:$0xff]
      %v1189 = vld [vmem:[%s587 + $0x8] sm:$0xff]
      %v1190 = vld [vmem:[%s587 + $0x10] sm:$0xff]
      %v1191 = vld [vmem:[%s587 + $0x18] sm:$0xff]
      %v1192 = vld [vmem:[%s792] sm:$0xff]
      %v1193 = vld [vmem:[%s792 + $0x8] sm:$0xff]
      %v1194 = vld [vmem:[%s792 + $0x10] sm:$0xff]
      %v1195 = vld [vmem:[%s792 + $0x18] sm:$0xff]
      %v1196 = vld [vmem:[%s997] sm:$0xff]
      %v1197 = vld [vmem:[%s997 + $0x8] sm:$0xff]
      %v1198 = vld [vmem:[%s997 + $0x10] sm:$0xff]
      %v1199 = vld [vmem:[%s997 + $0x18] sm:$0xff]
      %s1200 = sadd.s32 %s154, 8
      %s1201 = smul.u32 %s1200, 32
      %s1202 = scalar_lea.vmem %s0, %s1201
      %v1203 = vld [vmem:[%s1202] sm:$0xff]
      %v1204 = vld [vmem:[%s1202 + $0x8] sm:$0xff]
      %v1205 = vld [vmem:[%s1202 + $0x10] sm:$0xff]
      %v1206 = vld [vmem:[%s1202 + $0x18] sm:$0xff]
      %v1207 = vld [vmem:[%s1] sm:$0xff]
      %v1208 = vld [vmem:[%s1 + $0x8] sm:$0xff]
      %v1209 = vld [vmem:[%s1 + $0x10] sm:$0xff]
      %v1210 = vld [vmem:[%s1 + $0x18] sm:$0xff]
      %v1211 = vld [vmem:[%s1 + $0x20] sm:$0xff]
      %v1212 = vld [vmem:[%s1 + $0x28] sm:$0xff]
      %v1213 = vld [vmem:[%s1 + $0x30] sm:$0xff]
      %v1214 = vld [vmem:[%s1 + $0x38] sm:$0xff]
      %v1215 = vld [vmem:[%s2] sm:$0xff]
      %v1216 = vld [vmem:[%s2 + $0x8] sm:$0xff]
      %v1217 = vld [vmem:[%s2 + $0x10] sm:$0xff]
      %v1218 = vld [vmem:[%s2 + $0x18] sm:$0xff]
      %v1219 = vld [vmem:[%s2 + $0x20] sm:$0xff]
      %v1220 = vld [vmem:[%s2 + $0x28] sm:$0xff]
      %v1221 = vld [vmem:[%s2 + $0x30] sm:$0xff]
      %v1222 = vld [vmem:[%s2 + $0x38] sm:$0xff]
      %1224 = vset.pattern.permute.xlu0 0
      %1225 = vperm.xlu0 %1224, %v1215
      %v1226 = vpop.permute.xlu0 %1225
      %1229 = vset.pattern.permute.xlu0 0
      %1230 = vperm.xlu0 %1229, %v1216
      %v1231 = vpop.permute.xlu0 %1230
      %1234 = vset.pattern.permute.xlu0 0
      %1235 = vperm.xlu0 %1234, %v1217
      %v1236 = vpop.permute.xlu0 %1235
      %1239 = vset.pattern.permute.xlu0 0
      %1240 = vperm.xlu0 %1239, %v1218
      %v1241 = vpop.permute.xlu0 %1240
      %1244 = vset.pattern.permute.xlu0 0
      %1245 = vperm.xlu0 %1244, %v1219
      %v1246 = vpop.permute.xlu0 %1245
      %1249 = vset.pattern.permute.xlu0 0
      %1250 = vperm.xlu0 %1249, %v1220
      %v1251 = vpop.permute.xlu0 %1250
      %1254 = vset.pattern.permute.xlu0 0
      %1255 = vperm.xlu0 %1254, %v1221
      %v1256 = vpop.permute.xlu0 %1255
      %1259 = vset.pattern.permute.xlu0 0
      %1260 = vperm.xlu0 %1259, %v1222
      %v1261 = vpop.permute.xlu0 %1260
      %1263 = vmatprep.subr.mxu0 0.0
      %1264 = vmatpush1.msra.mxu0 %v1188
      %1265 = vmatprep.subr.mxu0 0.0
      %1266 = vmatpush1.msra.mxu0 %v1189
      %1267 = vmatprep.subr.mxu0 0.0
      %1268 = vmatpush1.msra.mxu0 %v1190
      %1269 = vmatprep.subr.mxu0 0.0
      %1270 = vmatpush1.msra.mxu0 %v1191
      %1271 = vmatprep.subr.mxu0 0.0
      %1272 = vmatpush1.msra.mxu0 %v1192
      %1273 = vmatprep.subr.mxu0 0.0
      %1274 = vmatpush1.msra.mxu0 %v1193
      %1275 = vmatprep.subr.mxu0 0.0
      %1276 = vmatpush1.msra.mxu0 %v1194
      %1277 = vmatprep.subr.mxu0 0.0
      %1278 = vmatpush1.msra.mxu0 %v1195
      %1279 = vmatprep.subr.mxu0 0.0
      %1280 = vmatpush1.msra.mxu0 %v1196
      %1281 = vmatprep.subr.mxu0 0.0
      %1282 = vmatpush1.msra.mxu0 %v1197
      %1283 = vmatprep.subr.mxu0 0.0
      %1284 = vmatpush1.msra.mxu0 %v1198
      %1285 = vmatprep.subr.mxu0 0.0
      %1286 = vmatpush1.msra.mxu0 %v1199
      %1287 = vmatprep.subr.mxu0 0.0
      %1288 = vmatpush1.msra.mxu0 %v1203
      %1289 = vmatprep.subr.mxu0 0.0
      %1290 = vmatpush1.msra.mxu0 %v1204
      %1291 = vmatprep.subr.mxu0 0.0
      %1292 = vmatpush1.msra.mxu0 %v1205
      %1293 = vmatprep.subr.mxu0 0.0
      %1294 = vmatpush1.msra.mxu0 %v1206
      %1295 = vmatprep.subr.mxu0 0.0
      %1296 = vmatpush1.msra.mxu0 0.0
      %1297 = vmatprep.subr.mxu0 0.0
      %1298 = vmatpush1.msra.mxu0 0.0
      %1299 = vmatprep.subr.mxu0 0.0
      %1300 = vmatpush1.msra.mxu0 0.0
      %1301 = vmatprep.subr.mxu0 0.0
      %1302 = vmatpush1.msra.mxu0 0.0
      %1303 = vmatprep.subr.mxu0 0.0
      %1304 = vmatpush1.msra.mxu0 0.0
      %1305 = vmatprep.subr.mxu0 0.0
      %1306 = vmatpush1.msra.mxu0 0.0
      %1307 = vmatprep.subr.mxu0 0.0
      %1308 = vmatpush1.msra.mxu0 0.0
      %1309 = vmatprep.subr.mxu0 0.0
      %1310 = vmatpush1.msra.mxu0 0.0
      %1311 = vmatprep.subr.mxu0 0.0
      %1312 = vmatpush1.msra.mxu0 0.0
      %1313 = vmatprep.subr.mxu0 0.0
      %1314 = vmatpush1.msra.mxu0 0.0
      %1315 = vmatprep.subr.mxu0 0.0
      %1316 = vmatpush1.msra.mxu0 0.0
      %1317 = vmatprep.subr.mxu0 0.0
      %1318 = vmatpush1.msra.mxu0 0.0
      %1319 = vmatprep.subr.mxu0 0.0
      %1320 = vmatpush1.msra.mxu0 0.0
      %1321 = vmatprep.subr.mxu0 0.0
      %1322 = vmatpush1.msra.mxu0 0.0
      %1323 = vmatprep.subr.mxu0 0.0
      %1324 = vmatpush1.msra.mxu0 0.0
      %1325 = vmatprep.subr.mxu0 0.0
      %1326 = vmatpush1.msra.mxu0 0.0
      %1327 = vmatprep.mubr.f32.mxu0 0.0
      %1328 = vmatmul.mubr.f32.gmra.mrb[0].mxu0 %v1207
      %v1329 = vpop.f32.mrb[0].mxu0
      %v1330 = vadd.f32 %v1226, %v1329
      %v1331 = vpop.f32.mrb[0].mxu0
      %1332 = vmatprep.mubr.f32.mxu0 0.0
      %1333 = vmatmul.mubr.f32.gmra.mrb[0].mxu0 %v1208
      %v1334 = vpop.f32.mrb[0].mxu0
      %v1335 = vadd.f32 %v1231, %v1334
      %v1336 = vpop.f32.mrb[0].mxu0
      %1337 = vmatprep.mubr.f32.mxu0 0.0
      %1338 = vmatmul.mubr.f32.gmra.mrb[0].mxu0 %v1209
      %v1339 = vpop.f32.mrb[0].mxu0
      %v1340 = vadd.f32 %v1236, %v1339
      %v1341 = vpop.f32.mrb[0].mxu0
      %1342 = vmatprep.mubr.f32.mxu0 0.0
      %1343 = vmatmul.mubr.f32.gmra.mrb[0].mxu0 %v1210
      %v1344 = vpop.f32.mrb[0].mxu0
      %v1345 = vadd.f32 %v1241, %v1344
      %v1346 = vpop.f32.mrb[0].mxu0
      %1347 = vmatprep.mubr.f32.mxu0 0.0
      %1348 = vmatmul.mubr.f32.gmra.mrb[0].mxu0 %v1211
      %v1349 = vpop.f32.mrb[0].mxu0
      %v1350 = vadd.f32 %v1246, %v1349
      %v1351 = vpop.f32.mrb[0].mxu0
      %1352 = vmatprep.mubr.f32.mxu0 0.0
      %1353 = vmatmul.mubr.f32.gmra.mrb[0].mxu0 %v1212
      %v1354 = vpop.f32.mrb[0].mxu0
      %v1355 = vadd.f32 %v1251, %v1354
      %v1356 = vpop.f32.mrb[0].mxu0
      %1357 = vmatprep.mubr.f32.mxu0 0.0
      %1358 = vmatmul.mubr.f32.gmra.mrb[0].mxu0 %v1213
      %v1359 = vpop.f32.mrb[0].mxu0
      %v1360 = vadd.f32 %v1256, %v1359
      %v1361 = vpop.f32.mrb[0].mxu0
      %1362 = vmatprep.mubr.f32.mxu0 0.0
      %1363 = vmatmul.mubr.f32.gmra.mrb[0].mxu0 %v1214
      %v1364 = vpop.f32.mrb[0].mxu0
      %v1365 = vadd.f32 %v1261, %v1364
      %v1366 = vpop.f32.mrb[0].mxu0
      %1367 = vdwg.mxu0
      %v1368 = vmax.f32 %v1330, 0.0
      %v1369 = vmax.f32 %v1335, 0.0
      %v1370 = vmax.f32 %v1340, 0.0
      %v1371 = vmax.f32 %v1345, 0.0
      %v1372 = vmax.f32 %v1350, 0.0
      %v1373 = vmax.f32 %v1355, 0.0
      %v1374 = vmax.f32 %v1360, 0.0
      %v1375 = vmax.f32 %v1365, 0.0
      %v1376 = vsub.f32 %v1368, 1.0
      %v1377 = vsub.f32 %v1369, 1.0
      %v1378 = vsub.f32 %v1370, 1.0
      %v1379 = vsub.f32 %v1371, 1.0
      %v1380 = vsub.f32 %v1372, 1.0
      %v1381 = vsub.f32 %v1373, 1.0
      %v1382 = vsub.f32 %v1374, 1.0
      %v1383 = vsub.f32 %v1375, 1.0
      %s1384 = scalar_lea.vmem %s152, 320
      %1385 = vst.msk [vmem:[%s1384] sm:$0xff] %vm359, %v1376
      %1386 = vst.msk [vmem:[%s1384 + $0x8] sm:$0xff] %vm359, %v1377
      %1387 = vst.msk [vmem:[%s1384 + $0x10] sm:$0xff] %vm359, %v1378
      %1388 = vst.msk [vmem:[%s1384 + $0x18] sm:$0xff] %vm359, %v1379
      %1389 = vst.msk [vmem:[%s1384 + $0x20] sm:$0xff] %vm359, %v1380
      %1390 = vst.msk [vmem:[%s1384 + $0x28] sm:$0xff] %vm359, %v1381
      %1391 = vst.msk [vmem:[%s1384 + $0x30] sm:$0xff] %vm359, %v1382
      %1392 = vst.msk [vmem:[%s1384 + $0x38] sm:$0xff] %vm359, %v1383
      %v1393 = vld [vmem:[%s792] sm:$0xff]
      %v1394 = vld [vmem:[%s792 + $0x8] sm:$0xff]
      %v1395 = vld [vmem:[%s792 + $0x10] sm:$0xff]
      %v1396 = vld [vmem:[%s792 + $0x18] sm:$0xff]
      %v1397 = vld [vmem:[%s997] sm:$0xff]
      %v1398 = vld [vmem:[%s997 + $0x8] sm:$0xff]
      %v1399 = vld [vmem:[%s997 + $0x10] sm:$0xff]
      %v1400 = vld [vmem:[%s997 + $0x18] sm:$0xff]
      %v1401 = vld [vmem:[%s1202] sm:$0xff]
      %v1402 = vld [vmem:[%s1202 + $0x8] sm:$0xff]
      %v1403 = vld [vmem:[%s1202 + $0x10] sm:$0xff]
      %v1404 = vld [vmem:[%s1202 + $0x18] sm:$0xff]
      %s1405 = sadd.s32 %s154, 9
      %s1406 = smul.u32 %s1405, 32
      %s1407 = scalar_lea.vmem %s0, %s1406
      %v1408 = vld [vmem:[%s1407] sm:$0xff]
      %v1409 = vld [vmem:[%s1407 + $0x8] sm:$0xff]
      %v1410 = vld [vmem:[%s1407 + $0x10] sm:$0xff]
      %v1411 = vld [vmem:[%s1407 + $0x18] sm:$0xff]
      %v1412 = vld [vmem:[%s1] sm:$0xff]
      %v1413 = vld [vmem:[%s1 + $0x8] sm:$0xff]
      %v1414 = vld [vmem:[%s1 + $0x10] sm:$0xff]
      %v1415 = vld [vmem:[%s1 + $0x18] sm:$0xff]
      %v1416 = vld [vmem:[%s1 + $0x20] sm:$0xff]
      %v1417 = vld [vmem:[%s1 + $0x28] sm:$0xff]
      %v1418 = vld [vmem:[%s1 + $0x30] sm:$0xff]
      %v1419 = vld [vmem:[%s1 + $0x38] sm:$0xff]
      %v1420 = vld [vmem:[%s2] sm:$0xff]
      %v1421 = vld [vmem:[%s2 + $0x8] sm:$0xff]
      %v1422 = vld [vmem:[%s2 + $0x10] sm:$0xff]
      %v1423 = vld [vmem:[%s2 + $0x18] sm:$0xff]
      %v1424 = vld [vmem:[%s2 + $0x20] sm:$0xff]
      %v1425 = vld [vmem:[%s2 + $0x28] sm:$0xff]
      %v1426 = vld [vmem:[%s2 + $0x30] sm:$0xff]
      %v1427 = vld [vmem:[%s2 + $0x38] sm:$0xff]
      %1429 = vset.pattern.permute.xlu0 0
      %1430 = vperm.xlu0 %1429, %v1420
      %v1431 = vpop.permute.xlu0 %1430
      %1434 = vset.pattern.permute.xlu0 0
      %1435 = vperm.xlu0 %1434, %v1421
      %v1436 = vpop.permute.xlu0 %1435
      %1439 = vset.pattern.permute.xlu0 0
      %1440 = vperm.xlu0 %1439, %v1422
      %v1441 = vpop.permute.xlu0 %1440
      %1444 = vset.pattern.permute.xlu0 0
      %1445 = vperm.xlu0 %1444, %v1423
      %v1446 = vpop.permute.xlu0 %1445
      %1449 = vset.pattern.permute.xlu0 0
      %1450 = vperm.xlu0 %1449, %v1424
      %v1451 = vpop.permute.xlu0 %1450
      %1454 = vset.pattern.permute.xlu0 0
      %1455 = vperm.xlu0 %1454, %v1425
      %v1456 = vpop.permute.xlu0 %1455
      %1459 = vset.pattern.permute.xlu0 0
      %1460 = vperm.xlu0 %1459, %v1426
      %v1461 = vpop.permute.xlu0 %1460
      %1464 = vset.pattern.permute.xlu0 0
      %1465 = vperm.xlu0 %1464, %v1427
      %v1466 = vpop.permute.xlu0 %1465
      %1468 = vmatprep.subr.mxu0 0.0
      %1469 = vmatpush1.msra.mxu0 %v1393
      %1470 = vmatprep.subr.mxu0 0.0
      %1471 = vmatpush1.msra.mxu0 %v1394
      %1472 = vmatprep.subr.mxu0 0.0
      %1473 = vmatpush1.msra.mxu0 %v1395
      %1474 = vmatprep.subr.mxu0 0.0
      %1475 = vmatpush1.msra.mxu0 %v1396
      %1476 = vmatprep.subr.mxu0 0.0
      %1477 = vmatpush1.msra.mxu0 %v1397
      %1478 = vmatprep.subr.mxu0 0.0
      %1479 = vmatpush1.msra.mxu0 %v1398
      %1480 = vmatprep.subr.mxu0 0.0
      %1481 = vmatpush1.msra.mxu0 %v1399
      %1482 = vmatprep.subr.mxu0 0.0
      %1483 = vmatpush1.msra.mxu0 %v1400
      %1484 = vmatprep.subr.mxu0 0.0
      %1485 = vmatpush1.msra.mxu0 %v1401
      %1486 = vmatprep.subr.mxu0 0.0
      %1487 = vmatpush1.msra.mxu0 %v1402
      %1488 = vmatprep.subr.mxu0 0.0
      %1489 = vmatpush1.msra.mxu0 %v1403
      %1490 = vmatprep.subr.mxu0 0.0
      %1491 = vmatpush1.msra.mxu0 %v1404
      %1492 = vmatprep.subr.mxu0 0.0
      %1493 = vmatpush1.msra.mxu0 %v1408
      %1494 = vmatprep.subr.mxu0 0.0
      %1495 = vmatpush1.msra.mxu0 %v1409
      %1496 = vmatprep.subr.mxu0 0.0
      %1497 = vmatpush1.msra.mxu0 %v1410
      %1498 = vmatprep.subr.mxu0 0.0
      %1499 = vmatpush1.msra.mxu0 %v1411
      %1500 = vmatprep.subr.mxu0 0.0
      %1501 = vmatpush1.msra.mxu0 0.0
      %1502 = vmatprep.subr.mxu0 0.0
      %1503 = vmatpush1.msra.mxu0 0.0
      %1504 = vmatprep.subr.mxu0 0.0
      %1505 = vmatpush1.msra.mxu0 0.0
      %1506 = vmatprep.subr.mxu0 0.0
      %1507 = vmatpush1.msra.mxu0 0.0
      %1508 = vmatprep.subr.mxu0 0.0
      %1509 = vmatpush1.msra.mxu0 0.0
      %1510 = vmatprep.subr.mxu0 0.0
      %1511 = vmatpush1.msra.mxu0 0.0
      %1512 = vmatprep.subr.mxu0 0.0
      %1513 = vmatpush1.msra.mxu0 0.0
      %1514 = vmatprep.subr.mxu0 0.0
      %1515 = vmatpush1.msra.mxu0 0.0
      %1516 = vmatprep.subr.mxu0 0.0
      %1517 = vmatpush1.msra.mxu0 0.0
      %1518 = vmatprep.subr.mxu0 0.0
      %1519 = vmatpush1.msra.mxu0 0.0
      %1520 = vmatprep.subr.mxu0 0.0
      %1521 = vmatpush1.msra.mxu0 0.0
      %1522 = vmatprep.subr.mxu0 0.0
      %1523 = vmatpush1.msra.mxu0 0.0
      %1524 = vmatprep.subr.mxu0 0.0
      %1525 = vmatpush1.msra.mxu0 0.0
      %1526 = vmatprep.subr.mxu0 0.0
      %1527 = vmatpush1.msra.mxu0 0.0
      %1528 = vmatprep.subr.mxu0 0.0
      %1529 = vmatpush1.msra.mxu0 0.0
      %1530 = vmatprep.subr.mxu0 0.0
      %1531 = vmatpush1.msra.mxu0 0.0
      %1532 = vmatprep.mubr.f32.mxu0 0.0
      %1533 = vmatmul.mubr.f32.gmra.mrb[0].mxu0 %v1412
      %v1534 = vpop.f32.mrb[0].mxu0
      %v1535 = vadd.f32 %v1431, %v1534
      %v1536 = vpop.f32.mrb[0].mxu0
      %1537 = vmatprep.mubr.f32.mxu0 0.0
      %1538 = vmatmul.mubr.f32.gmra.mrb[0].mxu0 %v1413
      %v1539 = vpop.f32.mrb[0].mxu0
      %v1540 = vadd.f32 %v1436, %v1539
      %v1541 = vpop.f32.mrb[0].mxu0
      %1542 = vmatprep.mubr.f32.mxu0 0.0
      %1543 = vmatmul.mubr.f32.gmra.mrb[0].mxu0 %v1414
      %v1544 = vpop.f32.mrb[0].mxu0
      %v1545 = vadd.f32 %v1441, %v1544
      %v1546 = vpop.f32.mrb[0].mxu0
      %1547 = vmatprep.mubr.f32.mxu0 0.0
      %1548 = vmatmul.mubr.f32.gmra.mrb[0].mxu0 %v1415
      %v1549 = vpop.f32.mrb[0].mxu0
      %v1550 = vadd.f32 %v1446, %v1549
      %v1551 = vpop.f32.mrb[0].mxu0
      %1552 = vmatprep.mubr.f32.mxu0 0.0
      %1553 = vmatmul.mubr.f32.gmra.mrb[0].mxu0 %v1416
      %v1554 = vpop.f32.mrb[0].mxu0
      %v1555 = vadd.f32 %v1451, %v1554
      %v1556 = vpop.f32.mrb[0].mxu0
      %1557 = vmatprep.mubr.f32.mxu0 0.0
      %1558 = vmatmul.mubr.f32.gmra.mrb[0].mxu0 %v1417
      %v1559 = vpop.f32.mrb[0].mxu0
      %v1560 = vadd.f32 %v1456, %v1559
      %v1561 = vpop.f32.mrb[0].mxu0
      %1562 = vmatprep.mubr.f32.mxu0 0.0
      %1563 = vmatmul.mubr.f32.gmra.mrb[0].mxu0 %v1418
      %v1564 = vpop.f32.mrb[0].mxu0
      %v1565 = vadd.f32 %v1461, %v1564
      %v1566 = vpop.f32.mrb[0].mxu0
      %1567 = vmatprep.mubr.f32.mxu0 0.0
      %1568 = vmatmul.mubr.f32.gmra.mrb[0].mxu0 %v1419
      %v1569 = vpop.f32.mrb[0].mxu0
      %v1570 = vadd.f32 %v1466, %v1569
      %v1571 = vpop.f32.mrb[0].mxu0
      %1572 = vdwg.mxu0
      %v1573 = vmax.f32 %v1535, 0.0
      %v1574 = vmax.f32 %v1540, 0.0
      %v1575 = vmax.f32 %v1545, 0.0
      %v1576 = vmax.f32 %v1550, 0.0
      %v1577 = vmax.f32 %v1555, 0.0
      %v1578 = vmax.f32 %v1560, 0.0
      %v1579 = vmax.f32 %v1565, 0.0
      %v1580 = vmax.f32 %v1570, 0.0
      %v1581 = vsub.f32 %v1573, 1.0
      %v1582 = vsub.f32 %v1574, 1.0
      %v1583 = vsub.f32 %v1575, 1.0
      %v1584 = vsub.f32 %v1576, 1.0
      %v1585 = vsub.f32 %v1577, 1.0
      %v1586 = vsub.f32 %v1578, 1.0
      %v1587 = vsub.f32 %v1579, 1.0
      %v1588 = vsub.f32 %v1580, 1.0
      %s1589 = scalar_lea.vmem %s152, 384
      %1590 = vst.msk [vmem:[%s1589] sm:$0xff] %vm359, %v1581
      %1591 = vst.msk [vmem:[%s1589 + $0x8] sm:$0xff] %vm359, %v1582
      %1592 = vst.msk [vmem:[%s1589 + $0x10] sm:$0xff] %vm359, %v1583
      %1593 = vst.msk [vmem:[%s1589 + $0x18] sm:$0xff] %vm359, %v1584
      %1594 = vst.msk [vmem:[%s1589 + $0x20] sm:$0xff] %vm359, %v1585
      %1595 = vst.msk [vmem:[%s1589 + $0x28] sm:$0xff] %vm359, %v1586
      %1596 = vst.msk [vmem:[%s1589 + $0x30] sm:$0xff] %vm359, %v1587
      %1597 = vst.msk [vmem:[%s1589 + $0x38] sm:$0xff] %vm359, %v1588
      %v1598 = vld [vmem:[%s997] sm:$0xff]
      %v1599 = vld [vmem:[%s997 + $0x8] sm:$0xff]
      %v1600 = vld [vmem:[%s997 + $0x10] sm:$0xff]
      %v1601 = vld [vmem:[%s997 + $0x18] sm:$0xff]
      %v1602 = vld [vmem:[%s1202] sm:$0xff]
      %v1603 = vld [vmem:[%s1202 + $0x8] sm:$0xff]
      %v1604 = vld [vmem:[%s1202 + $0x10] sm:$0xff]
      %v1605 = vld [vmem:[%s1202 + $0x18] sm:$0xff]
      %v1606 = vld [vmem:[%s1407] sm:$0xff]
      %v1607 = vld [vmem:[%s1407 + $0x8] sm:$0xff]
      %v1608 = vld [vmem:[%s1407 + $0x10] sm:$0xff]
      %v1609 = vld [vmem:[%s1407 + $0x18] sm:$0xff]
      %s1610 = sadd.s32 %s154, 10
      %s1611 = smul.u32 %s1610, 32
      %s1612 = scalar_lea.vmem %s0, %s1611
      %v1613 = vld [vmem:[%s1612] sm:$0xff]
      %v1614 = vld [vmem:[%s1612 + $0x8] sm:$0xff]
      %v1615 = vld [vmem:[%s1612 + $0x10] sm:$0xff]
      %v1616 = vld [vmem:[%s1612 + $0x18] sm:$0xff]
      %v1617 = vld [vmem:[%s1] sm:$0xff]
      %v1618 = vld [vmem:[%s1 + $0x8] sm:$0xff]
      %v1619 = vld [vmem:[%s1 + $0x10] sm:$0xff]
      %v1620 = vld [vmem:[%s1 + $0x18] sm:$0xff]
      %v1621 = vld [vmem:[%s1 + $0x20] sm:$0xff]
      %v1622 = vld [vmem:[%s1 + $0x28] sm:$0xff]
      %v1623 = vld [vmem:[%s1 + $0x30] sm:$0xff]
      %v1624 = vld [vmem:[%s1 + $0x38] sm:$0xff]
      %v1625 = vld [vmem:[%s2] sm:$0xff]
      %v1626 = vld [vmem:[%s2 + $0x8] sm:$0xff]
      %v1627 = vld [vmem:[%s2 + $0x10] sm:$0xff]
      %v1628 = vld [vmem:[%s2 + $0x18] sm:$0xff]
      %v1629 = vld [vmem:[%s2 + $0x20] sm:$0xff]
      %v1630 = vld [vmem:[%s2 + $0x28] sm:$0xff]
      %v1631 = vld [vmem:[%s2 + $0x30] sm:$0xff]
      %v1632 = vld [vmem:[%s2 + $0x38] sm:$0xff]
      %1634 = vset.pattern.permute.xlu0 0
      %1635 = vperm.xlu0 %1634, %v1625
      %v1636 = vpop.permute.xlu0 %1635
      %1639 = vset.pattern.permute.xlu0 0
      %1640 = vperm.xlu0 %1639, %v1626
      %v1641 = vpop.permute.xlu0 %1640
      %1644 = vset.pattern.permute.xlu0 0
      %1645 = vperm.xlu0 %1644, %v1627
      %v1646 = vpop.permute.xlu0 %1645
      %1649 = vset.pattern.permute.xlu0 0
      %1650 = vperm.xlu0 %1649, %v1628
      %v1651 = vpop.permute.xlu0 %1650
      %1654 = vset.pattern.permute.xlu0 0
      %1655 = vperm.xlu0 %1654, %v1629
      %v1656 = vpop.permute.xlu0 %1655
      %1659 = vset.pattern.permute.xlu0 0
      %1660 = vperm.xlu0 %1659, %v1630
      %v1661 = vpop.permute.xlu0 %1660
      %1664 = vset.pattern.permute.xlu0 0
      %1665 = vperm.xlu0 %1664, %v1631
      %v1666 = vpop.permute.xlu0 %1665
      %1669 = vset.pattern.permute.xlu0 0
      %1670 = vperm.xlu0 %1669, %v1632
      %v1671 = vpop.permute.xlu0 %1670
      %1673 = vmatprep.subr.mxu0 0.0
      %1674 = vmatpush1.msra.mxu0 %v1598
      %1675 = vmatprep.subr.mxu0 0.0
      %1676 = vmatpush1.msra.mxu0 %v1599
      %1677 = vmatprep.subr.mxu0 0.0
      %1678 = vmatpush1.msra.mxu0 %v1600
      %1679 = vmatprep.subr.mxu0 0.0
      %1680 = vmatpush1.msra.mxu0 %v1601
      %1681 = vmatprep.subr.mxu0 0.0
      %1682 = vmatpush1.msra.mxu0 %v1602
      %1683 = vmatprep.subr.mxu0 0.0
      %1684 = vmatpush1.msra.mxu0 %v1603
      %1685 = vmatprep.subr.mxu0 0.0
      %1686 = vmatpush1.msra.mxu0 %v1604
      %1687 = vmatprep.subr.mxu0 0.0
      %1688 = vmatpush1.msra.mxu0 %v1605
      %1689 = vmatprep.subr.mxu0 0.0
      %1690 = vmatpush1.msra.mxu0 %v1606
      %1691 = vmatprep.subr.mxu0 0.0
      %1692 = vmatpush1.msra.mxu0 %v1607
      %1693 = vmatprep.subr.mxu0 0.0
      %1694 = vmatpush1.msra.mxu0 %v1608
      %1695 = vmatprep.subr.mxu0 0.0
      %1696 = vmatpush1.msra.mxu0 %v1609
      %1697 = vmatprep.subr.mxu0 0.0
      %1698 = vmatpush1.msra.mxu0 %v1613
      %1699 = vmatprep.subr.mxu0 0.0
      %1700 = vmatpush1.msra.mxu0 %v1614
      %1701 = vmatprep.subr.mxu0 0.0
      %1702 = vmatpush1.msra.mxu0 %v1615
      %1703 = vmatprep.subr.mxu0 0.0
      %1704 = vmatpush1.msra.mxu0 %v1616
      %1705 = vmatprep.subr.mxu0 0.0
      %1706 = vmatpush1.msra.mxu0 0.0
      %1707 = vmatprep.subr.mxu0 0.0
      %1708 = vmatpush1.msra.mxu0 0.0
      %1709 = vmatprep.subr.mxu0 0.0
      %1710 = vmatpush1.msra.mxu0 0.0
      %1711 = vmatprep.subr.mxu0 0.0
      %1712 = vmatpush1.msra.mxu0 0.0
      %1713 = vmatprep.subr.mxu0 0.0
      %1714 = vmatpush1.msra.mxu0 0.0
      %1715 = vmatprep.subr.mxu0 0.0
      %1716 = vmatpush1.msra.mxu0 0.0
      %1717 = vmatprep.subr.mxu0 0.0
      %1718 = vmatpush1.msra.mxu0 0.0
      %1719 = vmatprep.subr.mxu0 0.0
      %1720 = vmatpush1.msra.mxu0 0.0
      %1721 = vmatprep.subr.mxu0 0.0
      %1722 = vmatpush1.msra.mxu0 0.0
      %1723 = vmatprep.subr.mxu0 0.0
      %1724 = vmatpush1.msra.mxu0 0.0
      %1725 = vmatprep.subr.mxu0 0.0
      %1726 = vmatpush1.msra.mxu0 0.0
      %1727 = vmatprep.subr.mxu0 0.0
      %1728 = vmatpush1.msra.mxu0 0.0
      %1729 = vmatprep.subr.mxu0 0.0
      %1730 = vmatpush1.msra.mxu0 0.0
      %1731 = vmatprep.subr.mxu0 0.0
      %1732 = vmatpush1.msra.mxu0 0.0
      %1733 = vmatprep.subr.mxu0 0.0
      %1734 = vmatpush1.msra.mxu0 0.0
      %1735 = vmatprep.subr.mxu0 0.0
      %1736 = vmatpush1.msra.mxu0 0.0
      %1737 = vmatprep.mubr.f32.mxu0 0.0
      %1738 = vmatmul.mubr.f32.gmra.mrb[0].mxu0 %v1617
      %v1739 = vpop.f32.mrb[0].mxu0
      %v1740 = vadd.f32 %v1636, %v1739
      %v1741 = vpop.f32.mrb[0].mxu0
      %1742 = vmatprep.mubr.f32.mxu0 0.0
      %1743 = vmatmul.mubr.f32.gmra.mrb[0].mxu0 %v1618
      %v1744 = vpop.f32.mrb[0].mxu0
      %v1745 = vadd.f32 %v1641, %v1744
      %v1746 = vpop.f32.mrb[0].mxu0
      %1747 = vmatprep.mubr.f32.mxu0 0.0
      %1748 = vmatmul.mubr.f32.gmra.mrb[0].mxu0 %v1619
      %v1749 = vpop.f32.mrb[0].mxu0
      %v1750 = vadd.f32 %v1646, %v1749
      %v1751 = vpop.f32.mrb[0].mxu0
      %1752 = vmatprep.mubr.f32.mxu0 0.0
      %1753 = vmatmul.mubr.f32.gmra.mrb[0].mxu0 %v1620
      %v1754 = vpop.f32.mrb[0].mxu0
      %v1755 = vadd.f32 %v1651, %v1754
      %v1756 = vpop.f32.mrb[0].mxu0
      %1757 = vmatprep.mubr.f32.mxu0 0.0
      %1758 = vmatmul.mubr.f32.gmra.mrb[0].mxu0 %v1621
      %v1759 = vpop.f32.mrb[0].mxu0
      %v1760 = vadd.f32 %v1656, %v1759
      %v1761 = vpop.f32.mrb[0].mxu0
      %1762 = vmatprep.mubr.f32.mxu0 0.0
      %1763 = vmatmul.mubr.f32.gmra.mrb[0].mxu0 %v1622
      %v1764 = vpop.f32.mrb[0].mxu0
      %v1765 = vadd.f32 %v1661, %v1764
      %v1766 = vpop.f32.mrb[0].mxu0
      %1767 = vmatprep.mubr.f32.mxu0 0.0
      %1768 = vmatmul.mubr.f32.gmra.mrb[0].mxu0 %v1623
      %v1769 = vpop.f32.mrb[0].mxu0
      %v1770 = vadd.f32 %v1666, %v1769
      %v1771 = vpop.f32.mrb[0].mxu0
      %1772 = vmatprep.mubr.f32.mxu0 0.0
      %1773 = vmatmul.mubr.f32.gmra.mrb[0].mxu0 %v1624
      %v1774 = vpop.f32.mrb[0].mxu0
      %v1775 = vadd.f32 %v1671, %v1774
      %v1776 = vpop.f32.mrb[0].mxu0
      %1777 = vdwg.mxu0
      %v1778 = vmax.f32 %v1740, 0.0
      %v1779 = vmax.f32 %v1745, 0.0
      %v1780 = vmax.f32 %v1750, 0.0
      %v1781 = vmax.f32 %v1755, 0.0
      %v1782 = vmax.f32 %v1760, 0.0
      %v1783 = vmax.f32 %v1765, 0.0
      %v1784 = vmax.f32 %v1770, 0.0
      %v1785 = vmax.f32 %v1775, 0.0
      %v1786 = vsub.f32 %v1778, 1.0
      %v1787 = vsub.f32 %v1779, 1.0
      %v1788 = vsub.f32 %v1780, 1.0
      %v1789 = vsub.f32 %v1781, 1.0
      %v1790 = vsub.f32 %v1782, 1.0
      %v1791 = vsub.f32 %v1783, 1.0
      %v1792 = vsub.f32 %v1784, 1.0
      %v1793 = vsub.f32 %v1785, 1.0
      %s1794 = scalar_lea.vmem %s152, 448
      %1795 = vst.msk [vmem:[%s1794] sm:$0xff] %vm359, %v1786
      %1796 = vst.msk [vmem:[%s1794 + $0x8] sm:$0xff] %vm359, %v1787
      %1797 = vst.msk [vmem:[%s1794 + $0x10] sm:$0xff] %vm359, %v1788
      %1798 = vst.msk [vmem:[%s1794 + $0x18] sm:$0xff] %vm359, %v1789
      %1799 = vst.msk [vmem:[%s1794 + $0x20] sm:$0xff] %vm359, %v1790
      %1800 = vst.msk [vmem:[%s1794 + $0x28] sm:$0xff] %vm359, %v1791
      %1801 = vst.msk [vmem:[%s1794 + $0x30] sm:$0xff] %vm359, %v1792
      %1802 = vst.msk [vmem:[%s1794 + $0x38] sm:$0xff] %vm359, %v1793
      %s1803 = smul.u32 8, %s14
      %p1804 = scmp.lt.s32.totalorder %s1803, 31
      %s1805 = scalar_select %p1804, %s1803, 31
      %s1806 = smul.addr %s1805, 8
      %s1807 = smul.addr %s1806, 8
      %s1808 = scalar_lea.vmem %s3, %s1807
      // Predicated region
      $region33: #{model_forward.1} parent=31 // pred_check
        %p1809 = pneg %p95
      $region34: #{model_forward.1} parent=31 // pred_check_branch
        %1811 = sbr.rel (%p1809) target = $region36
      $region35: #{model_forward.1} parent=31 // pred_region
        %s1812 = smul.u32 8, %s14
      $region36: #{model_forward.1} parent=31 // pred_fallthru
        _
    $region32: #{model_forward.1} parent=5 // pred_fallthru
      _
    %p1813 = scmp.le.s32.totalorder 2, %s9
    // Predicated region
    $region37: #{model_forward.1} parent=5 // pred_check
      %p1814 = pneg %p1813
    $region38: #{model_forward.1} parent=5 // pred_check_branch
      %1816 = sbr.rel (%p1814) target = $region40
    $region39: #{model_forward.1} parent=5 // pred_region
      %s1817 = ssub.s32 %s9, 2
      // Predicated region
      $region41: #{model_forward.1} parent=39 // pred_check
        %p1818 = pneg %p101
      $region42: #{model_forward.1} parent=39 // pred_check_branch
        %1820 = sbr.rel (%p1818) target = $region44
      $region43: #{model_forward.1} parent=39 // pred_region
        %s1821 = smul.u32 8, %s15
        %p1822 = scmp.lt.s32.totalorder %s1821, 31
        %s1823 = scalar_select %p1822, %s1821, 31
        %s1824 = smul.addr %s1823, 8
        %s1825 = smul.addr %s1824, 8
        %s1826 = scalar_lea.vmem %s3, %s1825
      $region44: #{model_forward.1} parent=39 // pred_fallthru
        _
    $region40: #{model_forward.1} parent=5 // pred_fallthru
      _
  $region6: #{model_forward.1} parent=0 // loop_footer
    %s13 = sadd.s32 1, %s9
  $region7: #{model_forward.1} parent=0 // loop_footer_branch
    %8 = sbr.rel target = $region3
  $region8: #{model_forward.1} parent=0 // loop_exit
    _

</llo_original>
